<compile_context>
chip_gen: v7x
topology: tpu7x:2x2x1
jax: 0.10.0
libtpu: 0.0.40
codegen_flags: <defaults>
</compile_context>

<pallas_src>
import functools

import jax
import jax.numpy as jnp
from jax.experimental import pallas as pl
from jax.experimental.pallas import tpu as pltpu

LANE = 128      # TPU lane width: hidden feature dim is padded to this.
SUBLANE = 8     # Row (sublane) alignment for batch tiles.


def _round_up(n, m):
    return ((n + m - 1) // m) * m


def mlp_kernel(x_ref, w1_ref, b1_ref, w2_ref, b2_ref, w3_ref, out_ref,
               *, nonlinearity):
    """One batch tile: (TB, input_dim) f32 -> (TB, output_dim) f32."""
    if nonlinearity == "tanh":
        act = jnp.tanh
    else:  # 'relu' (module default and fallback)
        act = lambda v: jnp.maximum(v, 0.0)

    # bf16 cast in-kernel (keeps x f32 and un-padded in HBM).
    x = x_ref[...].astype(jnp.bfloat16)

    # Layer 1: bf16 MXU matmul, f32 accumulate, f32 bias + activation.
    h = jnp.dot(x, w1_ref[...], preferred_element_type=jnp.float32) + b1_ref[...]
    h = act(h)

    # Layer 2
    h = jnp.dot(h.astype(jnp.bfloat16), w2_ref[...],
                preferred_element_type=jnp.float32) + b2_ref[...]
    h = act(h)

    # Layer 3 (no bias): store at the true output width (full-extent last dim).
    out_ref[...] = jnp.dot(h.astype(jnp.bfloat16), w3_ref[...],
                           preferred_element_type=jnp.float32)


def init_params(key, input_dim, hidden_dim, output_dim):
    """Mimics the PyTorch init: orthogonal weights, zero biases, no bias on layer 3.
    Weights stored as (in_features, out_features) so the kernel computes x @ W."""
    orth = jax.nn.initializers.orthogonal()
    k1, k2, k3 = jax.random.split(key, 3)
    return dict(
        w1=orth(k1, (input_dim, hidden_dim), jnp.float32),
        b1=jnp.zeros((hidden_dim,), jnp.float32),
        w2=orth(k2, (hidden_dim, hidden_dim), jnp.float32),
        b2=jnp.zeros((hidden_dim,), jnp.float32),
        w3=orth(k3, (hidden_dim, output_dim), jnp.float32),  # bias=None
    )


def prepare_params(params, *, lane=LANE):
    """Done ONCE: pad only the hidden dim to lane width, cast weights to bf16.
    Input rows of w1 and output cols of w3 are left at their true extents."""
    input_dim, hidden_dim = params["w1"].shape
    output_dim = params["w3"].shape[1]
    h_pad = _round_up(hidden_dim, lane)

    def pad2(a, r, c):
        return jnp.zeros((r, c), a.dtype).at[:a.shape[0], :a.shape[1]].set(a)

    w1 = pad2(params["w1"], input_dim, h_pad).astype(jnp.bfloat16)
    b1 = pad2(params["b1"].reshape(1, -1), 1, h_pad).astype(jnp.float32)
    w2 = pad2(params["w2"], h_pad, h_pad).astype(jnp.bfloat16)
    b2 = pad2(params["b2"].reshape(1, -1), 1, h_pad).astype(jnp.float32)
    w3 = pad2(params["w3"], h_pad, output_dim).astype(jnp.bfloat16)
    return (w1, b1, w2, b2, w3)


def _choose_block_b(batch, requested):
    """Largest sublane-aligned row tile <= requested, keeping >= 2 grid steps
    when the batch allows it (so v7x megacore sharding has work on both TCs)."""
    full = _round_up(max(batch, 1), SUBLANE)
    tb = min(_round_up(requested, SUBLANE), full)
    if pl.cdiv(full, tb) < 2 and full > SUBLANE:
        tb = _round_up(pl.cdiv(full, 2), SUBLANE)
    return tb


def mlp_forward(x, prepared, *, nonlinearity="relu", block_b=1024):
    """x: (B, input_dim) f32. Returns (B, output_dim) f32."""
    B, input_dim = x.shape
    w1, b1, w2, b2, w3 = prepared
    h_pad = w2.shape[0]
    output_dim = w3.shape[1]

    block_b = _choose_block_b(B, block_b)
    n_steps = pl.cdiv(B, block_b)
    b_pad = n_steps * block_b
    if b_pad != B:
        # Pad only the batch (rows are independent); feature dims stay as-is.
        x = jnp.pad(x, ((0, b_pad - B), (0, 0)))

    out = pl.pallas_call(
        functools.partial(mlp_kernel, nonlinearity=nonlinearity),
        out_shape=jax.ShapeDtypeStruct((b_pad, output_dim), jnp.float32),
        grid=(n_steps,),
        in_specs=[
            # x: tiled over rows; last dim = full array extent (no lane padding).
            pl.BlockSpec((block_b, input_dim), lambda i: (i, 0)),
            # Weights / biases: constant index_map -> fetched once, VMEM-resident.
            pl.BlockSpec((input_dim, h_pad), lambda i: (0, 0)),
            pl.BlockSpec((1, h_pad), lambda i: (0, 0)),
            pl.BlockSpec((h_pad, h_pad), lambda i: (0, 0)),
            pl.BlockSpec((1, h_pad), lambda i: (0, 0)),
            pl.BlockSpec((h_pad, output_dim), lambda i: (0, 0)),
        ],
        out_specs=pl.BlockSpec((block_b, output_dim), lambda i: (i, 0)),
        compiler_params=pltpu.CompilerParams(
            dimension_semantics=("parallel",)),
    )(x, w1, b1, w2, b2, w3)

    return out if b_pad == B else out[:B]


def reference_forward(x, params, *, nonlinearity="relu"):
    """Pure-JAX f32 reference matching the PyTorch module semantics."""
    act = jnp.tanh if nonlinearity == "tanh" else (lambda v: jnp.maximum(v, 0.0))
    h = act(x @ params["w1"] + params["b1"])
    h = act(h @ params["w2"] + params["b2"])
    return h @ params["w3"]


if __name__ == "__main__":
    # Batch large enough that the big row tiles amortize per-step overhead and
    # give exactly 2 "parallel" grid steps (v7x megacore); feature dims stay
    # small, matching the Hamiltonian-MLP use case.
    B, input_dim, hidden_dim, output_dim = 2048, 16, 32, 16
    nonlinearity = "relu"

    key = jax.random.PRNGKey(0)
    k_params, k_x = jax.random.split(key)

    params = init_params(k_params, input_dim, hidden_dim, output_dim)
    prepared = prepare_params(params)
    x = jax.random.normal(k_x, (B, input_dim), jnp.float32)

    out = mlp_forward(x, prepared, nonlinearity=nonlinearity)
    out = jax.block_until_ready(out)

    ref = reference_forward(x, params, nonlinearity=nonlinearity)
    assert out.shape == (B, output_dim)
    # bf16 matmul operands -> loosened tolerance vs the f32 reference.
    assert jnp.allclose(out, ref, rtol=3e-2, atol=3e-2), "mismatch vs reference"

    print("KERNEL_OK")
</pallas_src>

<mosaic_0001>
module attributes {stable_mosaic.version = 11 : i64} {
  func.func @mlp_kernel(%arg0: i32, %arg1: memref<1024x16xf32, #tpu.memory_space<vmem>>, %arg2: memref<16x128xbf16, #tpu.memory_space<vmem>>, %arg3: memref<1x128xf32, #tpu.memory_space<vmem>>, %arg4: memref<128x128xbf16, #tpu.memory_space<vmem>>, %arg5: memref<1x128xf32, #tpu.memory_space<vmem>>, %arg6: memref<128x16xbf16, #tpu.memory_space<vmem>>, %arg7: memref<1024x16xf32, #tpu.memory_space<vmem>>) attributes {dimension_semantics = [#tpu.dimension_semantics<parallel>], iteration_bounds = array<i64: 2>, scalar_prefetch = 0 : i64, scratch_operands = 0 : i64, tpu.core_type = #tpu.core_type<tc>, window_params = [{transform_indices = @transform_0, window_bounds = array<i64: 1024, 16>}, {pipeline_mode = #tpu.pipeline_mode<synchronous>, transform_indices = @transform_1, window_bounds = array<i64: 16, 128>}, {pipeline_mode = #tpu.pipeline_mode<synchronous>, transform_indices = @transform_2, window_bounds = array<i64: 1, 128>}, {pipeline_mode = #tpu.pipeline_mode<synchronous>, transform_indices = @transform_3, window_bounds = array<i64: 128, 128>}, {pipeline_mode = #tpu.pipeline_mode<synchronous>, transform_indices = @transform_4, window_bounds = array<i64: 1, 128>}, {pipeline_mode = #tpu.pipeline_mode<synchronous>, transform_indices = @transform_5, window_bounds = array<i64: 128, 16>}, {transform_indices = @transform_6, window_bounds = array<i64: 1024, 16>}]} {
    %c0 = arith.constant 0 : index
    %c0_0 = arith.constant 0 : index
    %0 = vector.load %arg1[%c0, %c0_0] : memref<1024x16xf32, #tpu.memory_space<vmem>>, vector<1024x16xf32>
    %1 = arith.truncf %0 : vector<1024x16xf32> to vector<1024x16xbf16>
    %c0_1 = arith.constant 0 : index
    %c0_2 = arith.constant 0 : index
    %2 = vector.load %arg2[%c0_1, %c0_2] : memref<16x128xbf16, #tpu.memory_space<vmem>>, vector<16x128xbf16>
    %cst = arith.constant dense<0.000000e+00> : vector<1024x128xf32>
    %3 = tpu.matmul %1, %2, %cst {dimension_numbers = #tpu.dot_dimension_numbers<[1], [0], [0], [1], [0, 0, 1, 1], [], []>} : vector<1024x16xbf16>, vector<16x128xbf16>, vector<1024x128xf32> -> vector<1024x128xf32>
    %c0_3 = arith.constant 0 : index
    %c0_4 = arith.constant 0 : index
    %4 = vector.load %arg3[%c0_3, %c0_4] : memref<1x128xf32, #tpu.memory_space<vmem>>, vector<1x128xf32>
    %5 = vector.broadcast %4 : vector<1x128xf32> to vector<1024x128xf32>
    %6 = arith.addf %3, %5 : vector<1024x128xf32>
    %cst_5 = arith.constant 0.000000e+00 : f32
    %7 = vector.broadcast %cst_5 : f32 to vector<1024x128xf32>
    %8 = arith.maximumf %6, %7 : vector<1024x128xf32>
    %9 = arith.truncf %8 : vector<1024x128xf32> to vector<1024x128xbf16>
    %c0_6 = arith.constant 0 : index
    %c0_7 = arith.constant 0 : index
    %10 = vector.load %arg4[%c0_6, %c0_7] : memref<128x128xbf16, #tpu.memory_space<vmem>>, vector<128x128xbf16>
    %cst_8 = arith.constant dense<0.000000e+00> : vector<1024x128xf32>
    %11 = tpu.matmul %9, %10, %cst_8 {dimension_numbers = #tpu.dot_dimension_numbers<[1], [0], [0], [1], [0, 0, 1, 1], [], []>} : vector<1024x128xbf16>, vector<128x128xbf16>, vector<1024x128xf32> -> vector<1024x128xf32>
    %c0_9 = arith.constant 0 : index
    %c0_10 = arith.constant 0 : index
    %12 = vector.load %arg5[%c0_9, %c0_10] : memref<1x128xf32, #tpu.memory_space<vmem>>, vector<1x128xf32>
    %13 = vector.broadcast %12 : vector<1x128xf32> to vector<1024x128xf32>
    %14 = arith.addf %11, %13 : vector<1024x128xf32>
    %cst_11 = arith.constant 0.000000e+00 : f32
    %15 = vector.broadcast %cst_11 : f32 to vector<1024x128xf32>
    %16 = arith.maximumf %14, %15 : vector<1024x128xf32>
    %17 = arith.truncf %16 : vector<1024x128xf32> to vector<1024x128xbf16>
    %c0_12 = arith.constant 0 : index
    %c0_13 = arith.constant 0 : index
    %18 = vector.load %arg6[%c0_12, %c0_13] : memref<128x16xbf16, #tpu.memory_space<vmem>>, vector<128x16xbf16>
    %cst_14 = arith.constant dense<0.000000e+00> : vector<1024x16xf32>
    %19 = tpu.matmul %17, %18, %cst_14 {dimension_numbers = #tpu.dot_dimension_numbers<[1], [0], [0], [1], [0, 0, 1, 1], [], []>} : vector<1024x128xbf16>, vector<128x16xbf16>, vector<1024x16xf32> -> vector<1024x16xf32>
    %c0_15 = arith.constant 0 : index
    %c0_16 = arith.constant 0 : index
    %20 = vector.load %arg7[%c0_15, %c0_16] : memref<1024x16xf32, #tpu.memory_space<vmem>>, vector<1024x16xf32>
    tpu.vector_store %arg7[%c0_15, %c0_16], %19 {strides = array<i32>} : memref<1024x16xf32, #tpu.memory_space<vmem>>, vector<1024x16xf32>,
    return
  }
  func.func @transform_0(%arg0: i32) -> (i32, i32) {
    %c0_i32 = arith.constant 0 : i32
    %c0_i32_0 = arith.constant 0 : i32
    return %arg0, %c0_i32 : i32, i32
  }
  func.func @transform_1(%arg0: i32) -> (i32, i32) {
    %c0_i32 = arith.constant 0 : i32
    %c0_i32_0 = arith.constant 0 : i32
    %c0_i32_1 = arith.constant 0 : i32
    return %c0_i32, %c0_i32_0 : i32, i32
  }
  func.func @transform_2(%arg0: i32) -> (i32, i32) {
    %c0_i32 = arith.constant 0 : i32
    %c0_i32_0 = arith.constant 0 : i32
    %c0_i32_1 = arith.constant 0 : i32
    return %c0_i32, %c0_i32_0 : i32, i32
  }
  func.func @transform_3(%arg0: i32) -> (i32, i32) {
    %c0_i32 = arith.constant 0 : i32
    %c0_i32_0 = arith.constant 0 : i32
    %c0_i32_1 = arith.constant 0 : i32
    return %c0_i32, %c0_i32_0 : i32, i32
  }
  func.func @transform_4(%arg0: i32) -> (i32, i32) {
    %c0_i32 = arith.constant 0 : i32
    %c0_i32_0 = arith.constant 0 : i32
    %c0_i32_1 = arith.constant 0 : i32
    return %c0_i32, %c0_i32_0 : i32, i32
  }
  func.func @transform_5(%arg0: i32) -> (i32, i32) {
    %c0_i32 = arith.constant 0 : i32
    %c0_i32_0 = arith.constant 0 : i32
    %c0_i32_1 = arith.constant 0 : i32
    return %c0_i32, %c0_i32_0 : i32, i32
  }
  func.func @transform_6(%arg0: i32) -> (i32, i32) {
    %c0_i32 = arith.constant 0 : i32
    %c0_i32_0 = arith.constant 0 : i32
    return %arg0, %c0_i32 : i32, i32
  }
}

</mosaic_0001>

<llo_original>
// kernel: tpu_custom_call.1
$region0: #{tpu_custom_call.1}
  #allocation0 [shape = 'u32[]', space=smem, size = 0x4, offset = 0x4, fixed_abs, tag = 'smem constant byte address 0x4 - core index']
  #allocation1 [shape = 'u32[144,128]{1,0:T(1,128)}', space=vmem, size = 0x12000, scoped, tag = 'internal scratch']
  %s0 = inlined_call_operand.vmem [shape: f32[2048,16], index: 0, kind: input, shape index: {}]
  %s1 = inlined_call_operand.vmem [shape: bf16[16,128], index: 1, kind: input, shape index: {}]
  %s2 = inlined_call_operand.vmem [shape: f32[1,128], index: 2, kind: input, shape index: {}]
  %s3 = inlined_call_operand.vmem [shape: bf16[128,128], index: 3, kind: input, shape index: {}]
  %s4 = inlined_call_operand.vmem [shape: f32[1,128], index: 4, kind: input, shape index: {}]
  %s5 = inlined_call_operand.vmem [shape: bf16[128,16], index: 5, kind: input, shape index: {}]
  %s6 = inlined_call_operand.vmem [shape: f32[2048,16], index: 6, kind: output, shape index: {}]
  %s7 = sld [smem:[#allocation0]]
  $region57: #{tpu_custom_call.1} parent=0
    _
  %s9 = ssub.s32 1, %s7
  %s10 = scalar_select 0, %s9, %s7
  loop: start=0, step=1, limit=4
  $region2: #{tpu_custom_call.1} parent=0 // loop_pre_header
    _
  $region3: #{tpu_custom_call.1} parent=0 // loop_header
    %s12 = sphi 0, %s16
    %p13 = scmp.ge.s32.totalorder %s12, 4
    %s22 = sphi 0, %s24
    %s25 = sphi 0, %s22
    %s26 = sphi 0, %s25
    %s42 = sphi 0, %s26
    %s46 = sphi 0, %s46
    %s48 = sphi 0, %s46
    %s49 = sphi 0, %s48
    %s63 = sphi 0, %s49
    %s67 = sphi 0, %s67
    %s69 = sphi 0, %s67
    %s70 = sphi 0, %s69
    %s84 = sphi 0, %s70
    %s88 = sphi 0, %s88
    %s90 = sphi 0, %s88
    %s91 = sphi 0, %s90
    %s105 = sphi 0, %s91
    %s109 = sphi 0, %s109
    %s111 = sphi 0, %s109
    %s112 = sphi 0, %s111
    %s126 = sphi 0, %s112
    %s130 = sphi 0, %s130
    %s132 = sphi 0, %s130
    %s133 = sphi 0, %s132
    %s147 = sphi 0, %s133
    %s153 = sphi 0, %s155
    %s156 = sphi 0, %s153
    %s157 = sphi 0, %s156
    %s173 = sphi 0, %s157
  $region4: #{tpu_custom_call.1} parent=0 // loop_header_branch
    %15 = sbr.rel (%p13) target = $region8
  $region5: #{tpu_custom_call.1} parent=0 // loop_body
    %s17 = ssub.s32 %s12, 1
    %s18 = ssub.s32 %s12, 2
    %s19 = sadd.s32 %s12, 1
    %s20 = ssub.s32 %s12, %s19
    %p21 = scmp.eq.s32.totalorder %s20, 0
    %s23 = sadd.s32 %s22, 1
    %s24 = scalar_select %p21, %s22, %s23
    %p27 = pneg %p21
    %p28 = scmp.eq.s32.totalorder %s12, 1
    %p29 = por %p27, %p28
    %p30 = scmp.ne.s32.totalorder %s22, %s25
    %p31 = scmp.eq.s32.totalorder %s12, 0
    %p32 = por %p30, %p31
    %p33 = scmp.ne.s32.totalorder %s22, %s25
    %p34 = scmp.eq.s32.totalorder %s17, 1
    %p35 = por %p33, %p34
    %p36 = scmp.ne.s32.totalorder %s25, %s26
    %p37 = scmp.eq.s32.totalorder %s17, 0
    %p38 = por %p36, %p37
    %p39 = scmp.ne.s32.totalorder %s25, %s26
    %p40 = scmp.eq.s32.totalorder %s18, 1
    %p41 = por %p39, %p40
    %p43 = scmp.ne.s32.totalorder %s26, %s42
    %p44 = scmp.eq.s32.totalorder %s18, 0
    %p45 = por %p43, %p44
    %s47 = sadd.s32 %s46, 1
    %p50 = scmp.eq.s32.totalorder %s12, 1
    %p51 = scmp.ne.s32.totalorder %s46, %s48
    %p52 = scmp.eq.s32.totalorder %s12, 0
    %p53 = por %p51, %p52
    %p54 = scmp.ne.s32.totalorder %s46, %s48
    %p55 = scmp.eq.s32.totalorder %s17, 1
    %p56 = por %p54, %p55
    %p57 = scmp.ne.s32.totalorder %s48, %s49
    %p58 = scmp.eq.s32.totalorder %s17, 0
    %p59 = por %p57, %p58
    %p60 = scmp.ne.s32.totalorder %s48, %s49
    %p61 = scmp.eq.s32.totalorder %s18, 1
    %p62 = por %p60, %p61
    %p64 = scmp.ne.s32.totalorder %s49, %s63
    %p65 = scmp.eq.s32.totalorder %s18, 0
    %p66 = por %p64, %p65
    %s68 = sadd.s32 %s67, 1
    %p71 = scmp.eq.s32.totalorder %s12, 1
    %p72 = scmp.ne.s32.totalorder %s67, %s69
    %p73 = scmp.eq.s32.totalorder %s12, 0
    %p74 = por %p72, %p73
    %p75 = scmp.ne.s32.totalorder %s67, %s69
    %p76 = scmp.eq.s32.totalorder %s17, 1
    %p77 = por %p75, %p76
    %p78 = scmp.ne.s32.totalorder %s69, %s70
    %p79 = scmp.eq.s32.totalorder %s17, 0
    %p80 = por %p78, %p79
    %p81 = scmp.ne.s32.totalorder %s69, %s70
    %p82 = scmp.eq.s32.totalorder %s18, 1
    %p83 = por %p81, %p82
    %p85 = scmp.ne.s32.totalorder %s70, %s84
    %p86 = scmp.eq.s32.totalorder %s18, 0
    %p87 = por %p85, %p86
    %s89 = sadd.s32 %s88, 1
    %p92 = scmp.eq.s32.totalorder %s12, 1
    %p93 = scmp.ne.s32.totalorder %s88, %s90
    %p94 = scmp.eq.s32.totalorder %s12, 0
    %p95 = por %p93, %p94
    %p96 = scmp.ne.s32.totalorder %s88, %s90
    %p97 = scmp.eq.s32.totalorder %s17, 1
    %p98 = por %p96, %p97
    %p99 = scmp.ne.s32.totalorder %s90, %s91
    %p100 = scmp.eq.s32.totalorder %s17, 0
    %p101 = por %p99, %p100
    %p102 = scmp.ne.s32.totalorder %s90, %s91
    %p103 = scmp.eq.s32.totalorder %s18, 1
    %p104 = por %p102, %p103
    %p106 = scmp.ne.s32.totalorder %s91, %s105
    %p107 = scmp.eq.s32.totalorder %s18, 0
    %p108 = por %p106, %p107
    %s110 = sadd.s32 %s109, 1
    %p113 = scmp.eq.s32.totalorder %s12, 1
    %p114 = scmp.ne.s32.totalorder %s109, %s111
    %p115 = scmp.eq.s32.totalorder %s12, 0
    %p116 = por %p114, %p115
    %p117 = scmp.ne.s32.totalorder %s109, %s111
    %p118 = scmp.eq.s32.totalorder %s17, 1
    %p119 = por %p117, %p118
    %p120 = scmp.ne.s32.totalorder %s111, %s112
    %p121 = scmp.eq.s32.totalorder %s17, 0
    %p122 = por %p120, %p121
    %p123 = scmp.ne.s32.totalorder %s111, %s112
    %p124 = scmp.eq.s32.totalorder %s18, 1
    %p125 = por %p123, %p124
    %p127 = scmp.ne.s32.totalorder %s112, %s126
    %p128 = scmp.eq.s32.totalorder %s18, 0
    %p129 = por %p127, %p128
    %s131 = sadd.s32 %s130, 1
    %p134 = scmp.eq.s32.totalorder %s12, 1
    %p135 = scmp.ne.s32.totalorder %s130, %s132
    %p136 = scmp.eq.s32.totalorder %s12, 0
    %p137 = por %p135, %p136
    %p138 = scmp.ne.s32.totalorder %s130, %s132
    %p139 = scmp.eq.s32.totalorder %s17, 1
    %p140 = por %p138, %p139
    %p141 = scmp.ne.s32.totalorder %s132, %s133
    %p142 = scmp.eq.s32.totalorder %s17, 0
    %p143 = por %p141, %p142
    %p144 = scmp.ne.s32.totalorder %s132, %s133
    %p145 = scmp.eq.s32.totalorder %s18, 1
    %p146 = por %p144, %p145
    %p148 = scmp.ne.s32.totalorder %s133, %s147
    %p149 = scmp.eq.s32.totalorder %s18, 0
    %p150 = por %p148, %p149
    %s151 = ssub.s32 %s12, %s19
    %p152 = scmp.eq.s32.totalorder %s151, 0
    %s154 = sadd.s32 %s153, 1
    %s155 = scalar_select %p152, %s153, %s154
    %p158 = pneg %p152
    %p159 = scmp.eq.s32.totalorder %s12, 1
    %p160 = por %p158, %p159
    %p161 = scmp.ne.s32.totalorder %s153, %s156
    %p162 = scmp.eq.s32.totalorder %s12, 0
    %p163 = por %p161, %p162
    %p164 = scmp.ne.s32.totalorder %s153, %s156
    %p165 = scmp.eq.s32.totalorder %s17, 1
    %p166 = por %p164, %p165
    %p167 = scmp.ne.s32.totalorder %s156, %s157
    %p168 = scmp.eq.s32.totalorder %s17, 0
    %p169 = por %p167, %p168
    %p170 = scmp.ne.s32.totalorder %s156, %s157
    %p171 = scmp.eq.s32.totalorder %s18, 1
    %p172 = por %p170, %p171
    %p174 = scmp.ne.s32.totalorder %s157, %s173
    %p175 = scmp.eq.s32.totalorder %s18, 0
    %p176 = por %p174, %p175
    %p177 = scmp.le.s32.totalorder 1, %s12
    %p178 = scmp.lt.s32.totalorder %s12, 3
    %p179 = pnand %p177, %p178
    %p180 = pneg %p179
    // Predicated region
    $region9: #{tpu_custom_call.1} parent=5 // pred_check
      _
    $region10: #{tpu_custom_call.1} parent=5 // pred_check_branch
      %182 = sbr.rel (%p179) target = $region12
    $region11: #{tpu_custom_call.1} parent=5 // pred_region
      %s183 = ssub.s32 %s12, 1
      // Predicated region
      $region13: #{tpu_custom_call.1} parent=11 // pred_check
        %p184 = pneg %p59
      $region14: #{tpu_custom_call.1} parent=11 // pred_check_branch
        %186 = sbr.rel (%p184) target = $region16
      $region15: #{tpu_custom_call.1} parent=11 // pred_region
        _
      $region16: #{tpu_custom_call.1} parent=11 // pred_fallthru
        _
      // Predicated region
      $region17: #{tpu_custom_call.1} parent=11 // pred_check
        %p187 = pneg %p80
      $region18: #{tpu_custom_call.1} parent=11 // pred_check_branch
        %189 = sbr.rel (%p187) target = $region20
      $region19: #{tpu_custom_call.1} parent=11 // pred_region
        _
      $region20: #{tpu_custom_call.1} parent=11 // pred_fallthru
        _
      // Predicated region
      $region21: #{tpu_custom_call.1} parent=11 // pred_check
        %p190 = pneg %p101
      $region22: #{tpu_custom_call.1} parent=11 // pred_check_branch
        %192 = sbr.rel (%p190) target = $region24
      $region23: #{tpu_custom_call.1} parent=11 // pred_region
        _
      $region24: #{tpu_custom_call.1} parent=11 // pred_fallthru
        _
      // Predicated region
      $region25: #{tpu_custom_call.1} parent=11 // pred_check
        %p193 = pneg %p122
      $region26: #{tpu_custom_call.1} parent=11 // pred_check_branch
        %195 = sbr.rel (%p193) target = $region28
      $region27: #{tpu_custom_call.1} parent=11 // pred_region
        _
      $region28: #{tpu_custom_call.1} parent=11 // pred_fallthru
        _
      // Predicated region
      $region29: #{tpu_custom_call.1} parent=11 // pred_check
        %p196 = pneg %p143
      $region30: #{tpu_custom_call.1} parent=11 // pred_check_branch
        %198 = sbr.rel (%p196) target = $region32
      $region31: #{tpu_custom_call.1} parent=11 // pred_region
        _
      $region32: #{tpu_custom_call.1} parent=11 // pred_fallthru
        _
    $region12: #{tpu_custom_call.1} parent=5 // pred_fallthru
      _
    %p199 = scmp.lt.s32.totalorder %s12, 2
    // Predicated region
    $region33: #{tpu_custom_call.1} parent=5 // pred_check
      %p200 = pneg %p199
    $region34: #{tpu_custom_call.1} parent=5 // pred_check_branch
      %202 = sbr.rel (%p200) target = $region36
    $region35: #{tpu_custom_call.1} parent=5 // pred_region
      // Predicated region
      $region37: #{tpu_custom_call.1} parent=35 // pred_check
        %p203 = pneg %p32
      $region38: #{tpu_custom_call.1} parent=35 // pred_check_branch
        %205 = sbr.rel (%p203) target = $region40
      $region39: #{tpu_custom_call.1} parent=35 // pred_region
        %s206 = smul.u32 128, %s12
        %p207 = scmp.lt.s32.totalorder %s206, 255
        %s208 = scalar_select %p207, %s206, 255
        %s209 = smul.addr %s208, 8
        %s210 = scalar_lea.vmem %s0, %s209
        %s211 = smul.u32 128, %s12
      $region40: #{tpu_custom_call.1} parent=35 // pred_fallthru
        _
    $region36: #{tpu_custom_call.1} parent=5 // pred_fallthru
      _
    %p212 = scmp.le.s32.totalorder 1, %s12
    %p213 = scmp.lt.s32.totalorder %s12, 3
    %p214 = pnand %p212, %p213
    %p215 = pneg %p214
    // Predicated region
    $region41: #{tpu_custom_call.1} parent=5 // pred_check
      _
    $region42: #{tpu_custom_call.1} parent=5 // pred_check_branch
      %217 = sbr.rel (%p214) target = $region44
    $region43: #{tpu_custom_call.1} parent=5 // pred_region
      %s218 = ssub.s32 %s12, 1
      %s219 = smul.u32 128, %s17
      %p220 = scmp.lt.s32.totalorder %s219, 255
      %s221 = scalar_select %p220, %s219, 255
      %s222 = smul.addr %s221, 8
      %s223 = scalar_lea.vmem %s0, %s222
      %p224 = pneg %p38
      %p225 = pneg %p35
      %p226 = pneg %p59
      %p227 = pneg %p56
      %p228 = pneg %p80
      %p229 = pneg %p77
      %p230 = pneg %p101
      %p231 = pneg %p98
      %p232 = pneg %p122
      %p233 = pneg %p119
      %p234 = pneg %p143
      %p235 = pneg %p140
      %p236 = pneg %p169
      %p237 = pneg %p166
      %s238 = smul.u32 128, %s17
      %p239 = scmp.lt.s32.totalorder %s238, 255
      %s240 = scalar_select %p239, %s238, 255
      %s241 = smul.addr %s240, 8
      %s242 = scalar_lea.vmem %s6, %s241
      %s243 = smul.u32 128, %s17
      %p244 = scmp.lt.s32.totalorder %s243, 255
      %s245 = scalar_select %p244, %s243, 255
      %s246 = smul.addr %s245, 8
      %s247 = scalar_lea.vmem %s0, %s246
      %s248 = smul.u32 128, %s17
      %s249 = smul.u32 128, %s17
      %p250 = scmp.lt.s32.totalorder %s249, 255
      %s251 = scalar_select %p250, %s249, 255
      %s252 = smul.addr %s251, 8
      %s253 = scalar_lea.vmem %s6, %s252
      %s254 = smul.u32 128, %s17
      %v256 = vld [vmem:[%s247] sm:$0xff]
      %v257 = vld [vmem:[%s247 + $0x8] sm:$0xff]
      %v258 = vld [vmem:[%s247 + $0x10] sm:$0xff]
      %v259 = vld [vmem:[%s247 + $0x18] sm:$0xff]
      %v260 = vld [vmem:[%s247 + $0x20] sm:$0xff]
      %v261 = vld [vmem:[%s247 + $0x28] sm:$0xff]
      %v262 = vld [vmem:[%s247 + $0x30] sm:$0xff]
      %v263 = vld [vmem:[%s247 + $0x38] sm:$0xff]
      %v264 = vld [vmem:[%s247 + $0x40] sm:$0xff]
      %v265 = vld [vmem:[%s247 + $0x48] sm:$0xff]
      %v266 = vld [vmem:[%s247 + $0x50] sm:$0xff]
      %v267 = vld [vmem:[%s247 + $0x58] sm:$0xff]
      %v268 = vld [vmem:[%s247 + $0x60] sm:$0xff]
      %v269 = vld [vmem:[%s247 + $0x68] sm:$0xff]
      %v270 = vld [vmem:[%s247 + $0x70] sm:$0xff]
      %v271 = vld [vmem:[%s247 + $0x78] sm:$0xff]
      %v272 = vld [vmem:[%s247 + $0x80] sm:$0xff]
      %v273 = vld [vmem:[%s247 + $0x88] sm:$0xff]
      %v274 = vld [vmem:[%s247 + $0x90] sm:$0xff]
      %v275 = vld [vmem:[%s247 + $0x98] sm:$0xff]
      %v276 = vld [vmem:[%s247 + $0xa0] sm:$0xff]
      %v277 = vld [vmem:[%s247 + $0xa8] sm:$0xff]
      %v278 = vld [vmem:[%s247 + $0xb0] sm:$0xff]
      %v279 = vld [vmem:[%s247 + $0xb8] sm:$0xff]
      %v280 = vld [vmem:[%s247 + $0xc0] sm:$0xff]
      %v281 = vld [vmem:[%s247 + $0xc8] sm:$0xff]
      %v282 = vld [vmem:[%s247 + $0xd0] sm:$0xff]
      %v283 = vld [vmem:[%s247 + $0xd8] sm:$0xff]
      %v284 = vld [vmem:[%s247 + $0xe0] sm:$0xff]
      %v285 = vld [vmem:[%s247 + $0xe8] sm:$0xff]
      %v286 = vld [vmem:[%s247 + $0xf0] sm:$0xff]
      %v287 = vld [vmem:[%s247 + $0xf8] sm:$0xff]
      %v288 = vld [vmem:[%s247 + $0x100] sm:$0xff]
      %v289 = vld [vmem:[%s247 + $0x108] sm:$0xff]
      %v290 = vld [vmem:[%s247 + $0x110] sm:$0xff]
      %v291 = vld [vmem:[%s247 + $0x118] sm:$0xff]
      %v292 = vld [vmem:[%s247 + $0x120] sm:$0xff]
      %v293 = vld [vmem:[%s247 + $0x128] sm:$0xff]
      %v294 = vld [vmem:[%s247 + $0x130] sm:$0xff]
      %v295 = vld [vmem:[%s247 + $0x138] sm:$0xff]
      %v296 = vld [vmem:[%s247 + $0x140] sm:$0xff]
      %v297 = vld [vmem:[%s247 + $0x148] sm:$0xff]
      %v298 = vld [vmem:[%s247 + $0x150] sm:$0xff]
      %v299 = vld [vmem:[%s247 + $0x158] sm:$0xff]
      %v300 = vld [vmem:[%s247 + $0x160] sm:$0xff]
      %v301 = vld [vmem:[%s247 + $0x168] sm:$0xff]
      %v302 = vld [vmem:[%s247 + $0x170] sm:$0xff]
      %v303 = vld [vmem:[%s247 + $0x178] sm:$0xff]
      %v304 = vld [vmem:[%s247 + $0x180] sm:$0xff]
      %v305 = vld [vmem:[%s247 + $0x188] sm:$0xff]
      %v306 = vld [vmem:[%s247 + $0x190] sm:$0xff]
      %v307 = vld [vmem:[%s247 + $0x198] sm:$0xff]
      %v308 = vld [vmem:[%s247 + $0x1a0] sm:$0xff]
      %v309 = vld [vmem:[%s247 + $0x1a8] sm:$0xff]
      %v310 = vld [vmem:[%s247 + $0x1b0] sm:$0xff]
      %v311 = vld [vmem:[%s247 + $0x1b8] sm:$0xff]
      %v312 = vld [vmem:[%s247 + $0x1c0] sm:$0xff]
      %v313 = vld [vmem:[%s247 + $0x1c8] sm:$0xff]
      %v314 = vld [vmem:[%s247 + $0x1d0] sm:$0xff]
      %v315 = vld [vmem:[%s247 + $0x1d8] sm:$0xff]
      %v316 = vld [vmem:[%s247 + $0x1e0] sm:$0xff]
      %v317 = vld [vmem:[%s247 + $0x1e8] sm:$0xff]
      %v318 = vld [vmem:[%s247 + $0x1f0] sm:$0xff]
      %v319 = vld [vmem:[%s247 + $0x1f8] sm:$0xff]
      %v320 = vld [vmem:[%s247 + $0x200] sm:$0xff]
      %v321 = vld [vmem:[%s247 + $0x208] sm:$0xff]
      %v322 = vld [vmem:[%s247 + $0x210] sm:$0xff]
      %v323 = vld [vmem:[%s247 + $0x218] sm:$0xff]
      %v324 = vld [vmem:[%s247 + $0x220] sm:$0xff]
      %v325 = vld [vmem:[%s247 + $0x228] sm:$0xff]
      %v326 = vld [vmem:[%s247 + $0x230] sm:$0xff]
      %v327 = vld [vmem:[%s247 + $0x238] sm:$0xff]
      %v328 = vld [vmem:[%s247 + $0x240] sm:$0xff]
      %v329 = vld [vmem:[%s247 + $0x248] sm:$0xff]
      %v330 = vld [vmem:[%s247 + $0x250] sm:$0xff]
      %v331 = vld [vmem:[%s247 + $0x258] sm:$0xff]
      %v332 = vld [vmem:[%s247 + $0x260] sm:$0xff]
      %v333 = vld [vmem:[%s247 + $0x268] sm:$0xff]
      %v334 = vld [vmem:[%s247 + $0x270] sm:$0xff]
      %v335 = vld [vmem:[%s247 + $0x278] sm:$0xff]
      %v336 = vld [vmem:[%s247 + $0x280] sm:$0xff]
      %v337 = vld [vmem:[%s247 + $0x288] sm:$0xff]
      %v338 = vld [vmem:[%s247 + $0x290] sm:$0xff]
      %v339 = vld [vmem:[%s247 + $0x298] sm:$0xff]
      %v340 = vld [vmem:[%s247 + $0x2a0] sm:$0xff]
      %v341 = vld [vmem:[%s247 + $0x2a8] sm:$0xff]
      %v342 = vld [vmem:[%s247 + $0x2b0] sm:$0xff]
      %v343 = vld [vmem:[%s247 + $0x2b8] sm:$0xff]
      %v344 = vld [vmem:[%s247 + $0x2c0] sm:$0xff]
      %v345 = vld [vmem:[%s247 + $0x2c8] sm:$0xff]
      %v346 = vld [vmem:[%s247 + $0x2d0] sm:$0xff]
      %v347 = vld [vmem:[%s247 + $0x2d8] sm:$0xff]
      %v348 = vld [vmem:[%s247 + $0x2e0] sm:$0xff]
      %v349 = vld [vmem:[%s247 + $0x2e8] sm:$0xff]
      %v350 = vld [vmem:[%s247 + $0x2f0] sm:$0xff]
      %v351 = vld [vmem:[%s247 + $0x2f8] sm:$0xff]
      %v352 = vld [vmem:[%s247 + $0x300] sm:$0xff]
      %v353 = vld [vmem:[%s247 + $0x308] sm:$0xff]
      %v354 = vld [vmem:[%s247 + $0x310] sm:$0xff]
      %v355 = vld [vmem:[%s247 + $0x318] sm:$0xff]
      %v356 = vld [vmem:[%s247 + $0x320] sm:$0xff]
      %v357 = vld [vmem:[%s247 + $0x328] sm:$0xff]
      %v358 = vld [vmem:[%s247 + $0x330] sm:$0xff]
      %v359 = vld [vmem:[%s247 + $0x338] sm:$0xff]
      %v360 = vld [vmem:[%s247 + $0x340] sm:$0xff]
      %v361 = vld [vmem:[%s247 + $0x348] sm:$0xff]
      %v362 = vld [vmem:[%s247 + $0x350] sm:$0xff]
      %v363 = vld [vmem:[%s247 + $0x358] sm:$0xff]
      %v364 = vld [vmem:[%s247 + $0x360] sm:$0xff]
      %v365 = vld [vmem:[%s247 + $0x368] sm:$0xff]
      %v366 = vld [vmem:[%s247 + $0x370] sm:$0xff]
      %v367 = vld [vmem:[%s247 + $0x378] sm:$0xff]
      %v368 = vld [vmem:[%s247 + $0x380] sm:$0xff]
      %v369 = vld [vmem:[%s247 + $0x388] sm:$0xff]
      %v370 = vld [vmem:[%s247 + $0x390] sm:$0xff]
      %v371 = vld [vmem:[%s247 + $0x398] sm:$0xff]
      %v372 = vld [vmem:[%s247 + $0x3a0] sm:$0xff]
      %v373 = vld [vmem:[%s247 + $0x3a8] sm:$0xff]
      %v374 = vld [vmem:[%s247 + $0x3b0] sm:$0xff]
      %v375 = vld [vmem:[%s247 + $0x3b8] sm:$0xff]
      %v376 = vld [vmem:[%s247 + $0x3c0] sm:$0xff]
      %v377 = vld [vmem:[%s247 + $0x3c8] sm:$0xff]
      %v378 = vld [vmem:[%s247 + $0x3d0] sm:$0xff]
      %v379 = vld [vmem:[%s247 + $0x3d8] sm:$0xff]
      %v380 = vld [vmem:[%s247 + $0x3e0] sm:$0xff]
      %v381 = vld [vmem:[%s247 + $0x3e8] sm:$0xff]
      %v382 = vld [vmem:[%s247 + $0x3f0] sm:$0xff]
      %v383 = vld [vmem:[%s247 + $0x3f8] sm:$0xff]
      %v384 = vpack.c.bf16 %v257, %v256
      %v385 = vpack.c.bf16 %v259, %v258
      %v386 = vpack.c.bf16 %v261, %v260
      %v387 = vpack.c.bf16 %v263, %v262
      %v388 = vpack.c.bf16 %v265, %v264
      %v389 = vpack.c.bf16 %v267, %v266
      %v390 = vpack.c.bf16 %v269, %v268
      %v391 = vpack.c.bf16 %v271, %v270
      %v392 = vpack.c.bf16 %v273, %v272
      %v393 = vpack.c.bf16 %v275, %v274
      %v394 = vpack.c.bf16 %v277, %v276
      %v395 = vpack.c.bf16 %v279, %v278
      %v396 = vpack.c.bf16 %v281, %v280
      %v397 = vpack.c.bf16 %v283, %v282
      %v398 = vpack.c.bf16 %v285, %v284
      %v399 = vpack.c.bf16 %v287, %v286
      %v400 = vpack.c.bf16 %v289, %v288
      %v401 = vpack.c.bf16 %v291, %v290
      %v402 = vpack.c.bf16 %v293, %v292
      %v403 = vpack.c.bf16 %v295, %v294
      %v404 = vpack.c.bf16 %v297, %v296
      %v405 = vpack.c.bf16 %v299, %v298
      %v406 = vpack.c.bf16 %v301, %v300
      %v407 = vpack.c.bf16 %v303, %v302
      %v408 = vpack.c.bf16 %v305, %v304
      %v409 = vpack.c.bf16 %v307, %v306
      %v410 = vpack.c.bf16 %v309, %v308
      %v411 = vpack.c.bf16 %v311, %v310
      %v412 = vpack.c.bf16 %v313, %v312
      %v413 = vpack.c.bf16 %v315, %v314
      %v414 = vpack.c.bf16 %v317, %v316
      %v415 = vpack.c.bf16 %v319, %v318
      %v416 = vpack.c.bf16 %v321, %v320
      %v417 = vpack.c.bf16 %v323, %v322
      %v418 = vpack.c.bf16 %v325, %v324
      %v419 = vpack.c.bf16 %v327, %v326
      %v420 = vpack.c.bf16 %v329, %v328
      %v421 = vpack.c.bf16 %v331, %v330
      %v422 = vpack.c.bf16 %v333, %v332
      %v423 = vpack.c.bf16 %v335, %v334
      %v424 = vpack.c.bf16 %v337, %v336
      %v425 = vpack.c.bf16 %v339, %v338
      %v426 = vpack.c.bf16 %v341, %v340
      %v427 = vpack.c.bf16 %v343, %v342
      %v428 = vpack.c.bf16 %v345, %v344
      %v429 = vpack.c.bf16 %v347, %v346
      %v430 = vpack.c.bf16 %v349, %v348
      %v431 = vpack.c.bf16 %v351, %v350
      %v432 = vpack.c.bf16 %v353, %v352
      %v433 = vpack.c.bf16 %v355, %v354
      %v434 = vpack.c.bf16 %v357, %v356
      %v435 = vpack.c.bf16 %v359, %v358
      %v436 = vpack.c.bf16 %v361, %v360
      %v437 = vpack.c.bf16 %v363, %v362
      %v438 = vpack.c.bf16 %v365, %v364
      %v439 = vpack.c.bf16 %v367, %v366
      %v440 = vpack.c.bf16 %v369, %v368
      %v441 = vpack.c.bf16 %v371, %v370
      %v442 = vpack.c.bf16 %v373, %v372
      %v443 = vpack.c.bf16 %v375, %v374
      %v444 = vpack.c.bf16 %v377, %v376
      %v445 = vpack.c.bf16 %v379, %v378
      %v446 = vpack.c.bf16 %v381, %v380
      %v447 = vpack.c.bf16 %v383, %v382
      %v448 = vld [vmem:[%s1] sm:$0xf]
      %v449 = vld [vmem:[%s1 + $0x4] sm:$0xf]
      %v450 = vld [vmem:[%s2] sm:$0x1]
      %v452 = vlaneseq
      %v453 = vshrl.u32 %v452, 7
      %v454 = vsub.s32 0, %v453
      %v455 = vrot.slane %v450, %v454
      %v459 = vunpack.c.l.b16 %v448
      %v460 = vunpack.c.l.b16 %v449
      %v461 = vpack.c.b16 %v460, %v459
      %vm463 = vcmask 130048
      %v465 = vsel %vm463, %v384, 0
      %v468 = vsel %vm463, %v385, 0
      %v471 = vsel %vm463, %v386, 0
      %v474 = vsel %vm463, %v387, 0
      %v477 = vsel %vm463, %v388, 0
      %v480 = vsel %vm463, %v389, 0
      %v483 = vsel %vm463, %v390, 0
      %v486 = vsel %vm463, %v391, 0
      %v489 = vsel %vm463, %v392, 0
      %v492 = vsel %vm463, %v393, 0
      %v495 = vsel %vm463, %v394, 0
      %v498 = vsel %vm463, %v395, 0
      %v501 = vsel %vm463, %v396, 0
      %v504 = vsel %vm463, %v397, 0
      %v507 = vsel %vm463, %v398, 0
      %v510 = vsel %vm463, %v399, 0
      %v513 = vsel %vm463, %v400, 0
      %v516 = vsel %vm463, %v401, 0
      %v519 = vsel %vm463, %v402, 0
      %v522 = vsel %vm463, %v403, 0
      %v525 = vsel %vm463, %v404, 0
      %v528 = vsel %vm463, %v405, 0
      %v531 = vsel %vm463, %v406, 0
      %v534 = vsel %vm463, %v407, 0
      %v537 = vsel %vm463, %v408, 0
      %v540 = vsel %vm463, %v409, 0
      %v543 = vsel %vm463, %v410, 0
      %v546 = vsel %vm463, %v411, 0
      %v549 = vsel %vm463, %v412, 0
      %v552 = vsel %vm463, %v413, 0
      %v555 = vsel %vm463, %v414, 0
      %v558 = vsel %vm463, %v415, 0
      %v561 = vsel %vm463, %v416, 0
      %v564 = vsel %vm463, %v417, 0
      %v567 = vsel %vm463, %v418, 0
      %v570 = vsel %vm463, %v419, 0
      %v573 = vsel %vm463, %v420, 0
      %v576 = vsel %vm463, %v421, 0
      %v579 = vsel %vm463, %v422, 0
      %v582 = vsel %vm463, %v423, 0
      %v585 = vsel %vm463, %v424, 0
      %v588 = vsel %vm463, %v425, 0
      %v591 = vsel %vm463, %v426, 0
      %v594 = vsel %vm463, %v427, 0
      %v597 = vsel %vm463, %v428, 0
      %v600 = vsel %vm463, %v429, 0
      %v603 = vsel %vm463, %v430, 0
      %v606 = vsel %vm463, %v431, 0
      %v609 = vsel %vm463, %v432, 0
      %v612 = vsel %vm463, %v433, 0
      %v615 = vsel %vm463, %v434, 0
      %v618 = vsel %vm463, %v435, 0
      %v621 = vsel %vm463, %v436, 0
      %v624 = vsel %vm463, %v437, 0
      %v627 = vsel %vm463, %v438, 0
      %v630 = vsel %vm463, %v439, 0
      %v633 = vsel %vm463, %v440, 0
      %v636 = vsel %vm463, %v441, 0
      %v639 = vsel %vm463, %v442, 0
      %v642 = vsel %vm463, %v443, 0
      %v645 = vsel %vm463, %v444, 0
      %v648 = vsel %vm463, %v445, 0
      %v651 = vsel %vm463, %v446, 0
      %v654 = vsel %vm463, %v447, 0
      %656 = vmatprep.subr.bf16.mxu0 0
      %657 = vmatpush1.bf16.msra.mxu0 %v461
      %658 = vmatprep.subr.bf16.mxu0 0
      %659 = vmatpush1.bf16.msra.mxu0 0
      %660 = vmatprep.subr.bf16.mxu0 0
      %661 = vmatpush1.bf16.msra.mxu0 0
      %662 = vmatprep.subr.bf16.mxu0 0
      %663 = vmatpush1.bf16.msra.mxu0 0
      %664 = vmatprep.subr.bf16.mxu0 0
      %665 = vmatpush1.bf16.msra.mxu0 0
      %666 = vmatprep.subr.bf16.mxu0 0
      %667 = vmatpush1.bf16.msra.mxu0 0
      %668 = vmatprep.subr.bf16.mxu0 0
      %669 = vmatpush1.bf16.msra.mxu0 0
      %670 = vmatprep.subr.bf16.mxu0 0
      %671 = vmatpush1.bf16.msra.mxu0 0
      %672 = vmatprep.subr.bf16.mxu0 0
      %673 = vmatpush1.bf16.msra.mxu0 0
      %674 = vmatprep.subr.bf16.mxu0 0
      %675 = vmatpush1.bf16.msra.mxu0 0
      %676 = vmatprep.subr.bf16.mxu0 0
      %677 = vmatpush1.bf16.msra.mxu0 0
      %678 = vmatprep.subr.bf16.mxu0 0
      %679 = vmatpush1.bf16.msra.mxu0 0
      %680 = vmatprep.subr.bf16.mxu0 0
      %681 = vmatpush1.bf16.msra.mxu0 0
      %682 = vmatprep.subr.bf16.mxu0 0
      %683 = vmatpush1.bf16.msra.mxu0 0
      %684 = vmatprep.subr.bf16.mxu0 0
      %685 = vmatpush1.bf16.msra.mxu0 0
      %686 = vmatprep.subr.bf16.mxu0 0
      %687 = vmatpush1.bf16.msra.mxu0 0
      %688 = vmatprep.mubr.bf16.mxu0 0
      %689 = vmatmul.mubr.bf16.gmra.mrb[0].mxu0 %v465
      %v690 = vpop.f32.mrb[0].mxu0
      %v691 = vadd.f32 %v455, %v690
      %v692 = vpop.f32.mrb[0].mxu0
      %v693 = vpop.f32.mrb[0].mxu0
      %v694 = vadd.f32 %v455, %v693
      %v695 = vpop.f32.mrb[0].mxu0
      %696 = vmatprep.mubr.bf16.mxu0 0
      %697 = vmatmul.mubr.bf16.gmra.mrb[0].mxu0 %v468
      %v698 = vpop.f32.mrb[0].mxu0
      %v699 = vadd.f32 %v455, %v698
      %v700 = vpop.f32.mrb[0].mxu0
      %v701 = vpop.f32.mrb[0].mxu0
      %v702 = vadd.f32 %v455, %v701
      %v703 = vpop.f32.mrb[0].mxu0
      %704 = vmatprep.mubr.bf16.mxu0 0
      %705 = vmatmul.mubr.bf16.gmra.mrb[0].mxu0 %v471
      %v706 = vpop.f32.mrb[0].mxu0
      %v707 = vadd.f32 %v455, %v706
      %v708 = vpop.f32.mrb[0].mxu0
      %v709 = vpop.f32.mrb[0].mxu0
      %v710 = vadd.f32 %v455, %v709
      %v711 = vpop.f32.mrb[0].mxu0
      %712 = vmatprep.mubr.bf16.mxu0 0
      %713 = vmatmul.mubr.bf16.gmra.mrb[0].mxu0 %v474
      %v714 = vpop.f32.mrb[0].mxu0
      %v715 = vadd.f32 %v455, %v714
      %v716 = vpop.f32.mrb[0].mxu0
      %v717 = vpop.f32.mrb[0].mxu0
      %v718 = vadd.f32 %v455, %v717
      %v719 = vpop.f32.mrb[0].mxu0
      %720 = vmatprep.mubr.bf16.mxu0 0
      %721 = vmatmul.mubr.bf16.gmra.mrb[0].mxu0 %v477
      %v722 = vpop.f32.mrb[0].mxu0
      %v723 = vadd.f32 %v455, %v722
      %v724 = vpop.f32.mrb[0].mxu0
      %v725 = vpop.f32.mrb[0].mxu0
      %v726 = vadd.f32 %v455, %v725
      %v727 = vpop.f32.mrb[0].mxu0
      %728 = vmatprep.mubr.bf16.mxu0 0
      %729 = vmatmul.mubr.bf16.gmra.mrb[0].mxu0 %v480
      %v730 = vpop.f32.mrb[0].mxu0
      %v731 = vadd.f32 %v455, %v730
      %v732 = vpop.f32.mrb[0].mxu0
      %v733 = vpop.f32.mrb[0].mxu0
      %v734 = vadd.f32 %v455, %v733
      %v735 = vpop.f32.mrb[0].mxu0
      %736 = vmatprep.mubr.bf16.mxu0 0
      %737 = vmatmul.mubr.bf16.gmra.mrb[0].mxu0 %v483
      %v738 = vpop.f32.mrb[0].mxu0
      %v739 = vadd.f32 %v455, %v738
      %v740 = vpop.f32.mrb[0].mxu0
      %v741 = vpop.f32.mrb[0].mxu0
      %v742 = vadd.f32 %v455, %v741
      %v743 = vpop.f32.mrb[0].mxu0
      %744 = vmatprep.mubr.bf16.mxu0 0
      %745 = vmatmul.mubr.bf16.gmra.mrb[0].mxu0 %v486
      %v746 = vpop.f32.mrb[0].mxu0
      %v747 = vadd.f32 %v455, %v746
      %v748 = vpop.f32.mrb[0].mxu0
      %v749 = vpop.f32.mrb[0].mxu0
      %v750 = vadd.f32 %v455, %v749
      %v751 = vpop.f32.mrb[0].mxu0
      %752 = vmatprep.mubr.bf16.mxu0 0
      %753 = vmatmul.mubr.bf16.gmra.mrb[0].mxu0 %v489
      %v754 = vpop.f32.mrb[0].mxu0
      %v755 = vadd.f32 %v455, %v754
      %v756 = vpop.f32.mrb[0].mxu0
      %v757 = vpop.f32.mrb[0].mxu0
      %v758 = vadd.f32 %v455, %v757
      %v759 = vpop.f32.mrb[0].mxu0
      %760 = vmatprep.mubr.bf16.mxu0 0
      %761 = vmatmul.mubr.bf16.gmra.mrb[0].mxu0 %v492
      %v762 = vpop.f32.mrb[0].mxu0
      %v763 = vadd.f32 %v455, %v762
      %v764 = vpop.f32.mrb[0].mxu0
      %v765 = vpop.f32.mrb[0].mxu0
      %v766 = vadd.f32 %v455, %v765
      %v767 = vpop.f32.mrb[0].mxu0
      %768 = vmatprep.mubr.bf16.mxu0 0
      %769 = vmatmul.mubr.bf16.gmra.mrb[0].mxu0 %v495
      %v770 = vpop.f32.mrb[0].mxu0
      %v771 = vadd.f32 %v455, %v770
      %v772 = vpop.f32.mrb[0].mxu0
      %v773 = vpop.f32.mrb[0].mxu0
      %v774 = vadd.f32 %v455, %v773
      %v775 = vpop.f32.mrb[0].mxu0
      %776 = vmatprep.mubr.bf16.mxu0 0
      %777 = vmatmul.mubr.bf16.gmra.mrb[0].mxu0 %v498
      %v778 = vpop.f32.mrb[0].mxu0
      %v779 = vadd.f32 %v455, %v778
      %v780 = vpop.f32.mrb[0].mxu0
      %v781 = vpop.f32.mrb[0].mxu0
      %v782 = vadd.f32 %v455, %v781
      %v783 = vpop.f32.mrb[0].mxu0
      %784 = vmatprep.mubr.bf16.mxu0 0
      %785 = vmatmul.mubr.bf16.gmra.mrb[0].mxu0 %v501
      %v786 = vpop.f32.mrb[0].mxu0
      %v787 = vadd.f32 %v455, %v786
      %v788 = vpop.f32.mrb[0].mxu0
      %v789 = vpop.f32.mrb[0].mxu0
      %v790 = vadd.f32 %v455, %v789
      %v791 = vpop.f32.mrb[0].mxu0
      %792 = vmatprep.mubr.bf16.mxu0 0
      %793 = vmatmul.mubr.bf16.gmra.mrb[0].mxu0 %v504
      %v794 = vpop.f32.mrb[0].mxu0
      %v795 = vadd.f32 %v455, %v794
      %v796 = vpop.f32.mrb[0].mxu0
      %v797 = vpop.f32.mrb[0].mxu0
      %v798 = vadd.f32 %v455, %v797
      %v799 = vpop.f32.mrb[0].mxu0
      %800 = vmatprep.mubr.bf16.mxu0 0
      %801 = vmatmul.mubr.bf16.gmra.mrb[0].mxu0 %v507
      %v802 = vpop.f32.mrb[0].mxu0
      %v803 = vadd.f32 %v455, %v802
      %v804 = vpop.f32.mrb[0].mxu0
      %v805 = vpop.f32.mrb[0].mxu0
      %v806 = vadd.f32 %v455, %v805
      %v807 = vpop.f32.mrb[0].mxu0
      %808 = vmatprep.mubr.bf16.mxu0 0
      %809 = vmatmul.mubr.bf16.gmra.mrb[0].mxu0 %v510
      %v810 = vpop.f32.mrb[0].mxu0
      %v811 = vadd.f32 %v455, %v810
      %v812 = vpop.f32.mrb[0].mxu0
      %v813 = vpop.f32.mrb[0].mxu0
      %v814 = vadd.f32 %v455, %v813
      %v815 = vpop.f32.mrb[0].mxu0
      %816 = vmatprep.mubr.bf16.mxu0 0
      %817 = vmatmul.mubr.bf16.gmra.mrb[0].mxu0 %v513
      %v818 = vpop.f32.mrb[0].mxu0
      %v819 = vadd.f32 %v455, %v818
      %v820 = vpop.f32.mrb[0].mxu0
      %v821 = vpop.f32.mrb[0].mxu0
      %v822 = vadd.f32 %v455, %v821
      %v823 = vpop.f32.mrb[0].mxu0
      %824 = vmatprep.mubr.bf16.mxu0 0
      %825 = vmatmul.mubr.bf16.gmra.mrb[0].mxu0 %v516
      %v826 = vpop.f32.mrb[0].mxu0
      %v827 = vadd.f32 %v455, %v826
      %v828 = vpop.f32.mrb[0].mxu0
      %v829 = vpop.f32.mrb[0].mxu0
      %v830 = vadd.f32 %v455, %v829
      %v831 = vpop.f32.mrb[0].mxu0
      %832 = vmatprep.mubr.bf16.mxu0 0
      %833 = vmatmul.mubr.bf16.gmra.mrb[0].mxu0 %v519
      %v834 = vpop.f32.mrb[0].mxu0
      %v835 = vadd.f32 %v455, %v834
      %v836 = vpop.f32.mrb[0].mxu0
      %v837 = vpop.f32.mrb[0].mxu0
      %v838 = vadd.f32 %v455, %v837
      %v839 = vpop.f32.mrb[0].mxu0
      %840 = vmatprep.mubr.bf16.mxu0 0
      %841 = vmatmul.mubr.bf16.gmra.mrb[0].mxu0 %v522
      %v842 = vpop.f32.mrb[0].mxu0
      %v843 = vadd.f32 %v455, %v842
      %v844 = vpop.f32.mrb[0].mxu0
      %v845 = vpop.f32.mrb[0].mxu0
      %v846 = vadd.f32 %v455, %v845
      %v847 = vpop.f32.mrb[0].mxu0
      %848 = vmatprep.mubr.bf16.mxu0 0
      %849 = vmatmul.mubr.bf16.gmra.mrb[0].mxu0 %v525
      %v850 = vpop.f32.mrb[0].mxu0
      %v851 = vadd.f32 %v455, %v850
      %v852 = vpop.f32.mrb[0].mxu0
      %v853 = vpop.f32.mrb[0].mxu0
      %v854 = vadd.f32 %v455, %v853
      %v855 = vpop.f32.mrb[0].mxu0
      %856 = vmatprep.mubr.bf16.mxu0 0
      %857 = vmatmul.mubr.bf16.gmra.mrb[0].mxu0 %v528
      %v858 = vpop.f32.mrb[0].mxu0
      %v859 = vadd.f32 %v455, %v858
      %v860 = vpop.f32.mrb[0].mxu0
      %v861 = vpop.f32.mrb[0].mxu0
      %v862 = vadd.f32 %v455, %v861
      %v863 = vpop.f32.mrb[0].mxu0
      %864 = vmatprep.mubr.bf16.mxu0 0
      %865 = vmatmul.mubr.bf16.gmra.mrb[0].mxu0 %v531
      %v866 = vpop.f32.mrb[0].mxu0
      %v867 = vadd.f32 %v455, %v866
      %v868 = vpop.f32.mrb[0].mxu0
      %v869 = vpop.f32.mrb[0].mxu0
      %v870 = vadd.f32 %v455, %v869
      %v871 = vpop.f32.mrb[0].mxu0
      %872 = vmatprep.mubr.bf16.mxu0 0
      %873 = vmatmul.mubr.bf16.gmra.mrb[0].mxu0 %v534
      %v874 = vpop.f32.mrb[0].mxu0
      %v875 = vadd.f32 %v455, %v874
      %v876 = vpop.f32.mrb[0].mxu0
      %v877 = vpop.f32.mrb[0].mxu0
      %v878 = vadd.f32 %v455, %v877
      %v879 = vpop.f32.mrb[0].mxu0
      %880 = vmatprep.mubr.bf16.mxu0 0
      %881 = vmatmul.mubr.bf16.gmra.mrb[0].mxu0 %v537
      %v882 = vpop.f32.mrb[0].mxu0
      %v883 = vadd.f32 %v455, %v882
      %v884 = vpop.f32.mrb[0].mxu0
      %v885 = vpop.f32.mrb[0].mxu0
      %v886 = vadd.f32 %v455, %v885
      %v887 = vpop.f32.mrb[0].mxu0
      %888 = vmatprep.mubr.bf16.mxu0 0
      %889 = vmatmul.mubr.bf16.gmra.mrb[0].mxu0 %v540
      %v890 = vpop.f32.mrb[0].mxu0
      %v891 = vadd.f32 %v455, %v890
      %v892 = vpop.f32.mrb[0].mxu0
      %v893 = vpop.f32.mrb[0].mxu0
      %v894 = vadd.f32 %v455, %v893
      %v895 = vpop.f32.mrb[0].mxu0
      %896 = vmatprep.mubr.bf16.mxu0 0
      %897 = vmatmul.mubr.bf16.gmra.mrb[0].mxu0 %v543
      %v898 = vpop.f32.mrb[0].mxu0
      %v899 = vadd.f32 %v455, %v898
      %v900 = vpop.f32.mrb[0].mxu0
      %v901 = vpop.f32.mrb[0].mxu0
      %v902 = vadd.f32 %v455, %v901
      %v903 = vpop.f32.mrb[0].mxu0
      %904 = vmatprep.mubr.bf16.mxu0 0
      %905 = vmatmul.mubr.bf16.gmra.mrb[0].mxu0 %v546
      %v906 = vpop.f32.mrb[0].mxu0
      %v907 = vadd.f32 %v455, %v906
      %v908 = vpop.f32.mrb[0].mxu0
      %v909 = vpop.f32.mrb[0].mxu0
      %v910 = vadd.f32 %v455, %v909
      %v911 = vpop.f32.mrb[0].mxu0
      %912 = vmatprep.mubr.bf16.mxu0 0
      %913 = vmatmul.mubr.bf16.gmra.mrb[0].mxu0 %v549
      %v914 = vpop.f32.mrb[0].mxu0
      %v915 = vadd.f32 %v455, %v914
      %v916 = vpop.f32.mrb[0].mxu0
      %v917 = vpop.f32.mrb[0].mxu0
      %v918 = vadd.f32 %v455, %v917
      %v919 = vpop.f32.mrb[0].mxu0
      %920 = vmatprep.mubr.bf16.mxu0 0
      %921 = vmatmul.mubr.bf16.gmra.mrb[0].mxu0 %v552
      %v922 = vpop.f32.mrb[0].mxu0
      %v923 = vadd.f32 %v455, %v922
      %v924 = vpop.f32.mrb[0].mxu0
      %v925 = vpop.f32.mrb[0].mxu0
      %v926 = vadd.f32 %v455, %v925
      %v927 = vpop.f32.mrb[0].mxu0
      %928 = vmatprep.mubr.bf16.mxu0 0
      %929 = vmatmul.mubr.bf16.gmra.mrb[0].mxu0 %v555
      %v930 = vpop.f32.mrb[0].mxu0
      %v931 = vadd.f32 %v455, %v930
      %v932 = vpop.f32.mrb[0].mxu0
      %v933 = vpop.f32.mrb[0].mxu0
      %v934 = vadd.f32 %v455, %v933
      %v935 = vpop.f32.mrb[0].mxu0
      %936 = vmatprep.mubr.bf16.mxu0 0
      %937 = vmatmul.mubr.bf16.gmra.mrb[0].mxu0 %v558
      %v938 = vpop.f32.mrb[0].mxu0
      %v939 = vadd.f32 %v455, %v938
      %v940 = vpop.f32.mrb[0].mxu0
      %v941 = vpop.f32.mrb[0].mxu0
      %v942 = vadd.f32 %v455, %v941
      %v943 = vpop.f32.mrb[0].mxu0
      %944 = vmatprep.mubr.bf16.mxu0 0
      %945 = vmatmul.mubr.bf16.gmra.mrb[0].mxu0 %v561
      %v946 = vpop.f32.mrb[0].mxu0
      %v947 = vadd.f32 %v455, %v946
      %v948 = vpop.f32.mrb[0].mxu0
      %v949 = vpop.f32.mrb[0].mxu0
      %v950 = vadd.f32 %v455, %v949
      %v951 = vpop.f32.mrb[0].mxu0
      %952 = vmatprep.mubr.bf16.mxu0 0
      %953 = vmatmul.mubr.bf16.gmra.mrb[0].mxu0 %v564
      %v954 = vpop.f32.mrb[0].mxu0
      %v955 = vadd.f32 %v455, %v954
      %v956 = vpop.f32.mrb[0].mxu0
      %v957 = vpop.f32.mrb[0].mxu0
      %v958 = vadd.f32 %v455, %v957
      %v959 = vpop.f32.mrb[0].mxu0
      %960 = vmatprep.mubr.bf16.mxu0 0
      %961 = vmatmul.mubr.bf16.gmra.mrb[0].mxu0 %v567
      %v962 = vpop.f32.mrb[0].mxu0
      %v963 = vadd.f32 %v455, %v962
      %v964 = vpop.f32.mrb[0].mxu0
      %v965 = vpop.f32.mrb[0].mxu0
      %v966 = vadd.f32 %v455, %v965
      %v967 = vpop.f32.mrb[0].mxu0
      %968 = vmatprep.mubr.bf16.mxu0 0
      %969 = vmatmul.mubr.bf16.gmra.mrb[0].mxu0 %v570
      %v970 = vpop.f32.mrb[0].mxu0
      %v971 = vadd.f32 %v455, %v970
      %v972 = vpop.f32.mrb[0].mxu0
      %v973 = vpop.f32.mrb[0].mxu0
      %v974 = vadd.f32 %v455, %v973
      %v975 = vpop.f32.mrb[0].mxu0
      %976 = vmatprep.mubr.bf16.mxu0 0
      %977 = vmatmul.mubr.bf16.gmra.mrb[0].mxu0 %v573
      %v978 = vpop.f32.mrb[0].mxu0
      %v979 = vadd.f32 %v455, %v978
      %v980 = vpop.f32.mrb[0].mxu0
      %v981 = vpop.f32.mrb[0].mxu0
      %v982 = vadd.f32 %v455, %v981
      %v983 = vpop.f32.mrb[0].mxu0
      %984 = vmatprep.mubr.bf16.mxu0 0
      %985 = vmatmul.mubr.bf16.gmra.mrb[0].mxu0 %v576
      %v986 = vpop.f32.mrb[0].mxu0
      %v987 = vadd.f32 %v455, %v986
      %v988 = vpop.f32.mrb[0].mxu0
      %v989 = vpop.f32.mrb[0].mxu0
      %v990 = vadd.f32 %v455, %v989
      %v991 = vpop.f32.mrb[0].mxu0
      %992 = vmatprep.mubr.bf16.mxu0 0
      %993 = vmatmul.mubr.bf16.gmra.mrb[0].mxu0 %v579
      %v994 = vpop.f32.mrb[0].mxu0
      %v995 = vadd.f32 %v455, %v994
      %v996 = vpop.f32.mrb[0].mxu0
      %v997 = vpop.f32.mrb[0].mxu0
      %v998 = vadd.f32 %v455, %v997
      %v999 = vpop.f32.mrb[0].mxu0
      %1000 = vmatprep.mubr.bf16.mxu0 0
      %1001 = vmatmul.mubr.bf16.gmra.mrb[0].mxu0 %v582
      %v1002 = vpop.f32.mrb[0].mxu0
      %v1003 = vadd.f32 %v455, %v1002
      %v1004 = vpop.f32.mrb[0].mxu0
      %v1005 = vpop.f32.mrb[0].mxu0
      %v1006 = vadd.f32 %v455, %v1005
      %v1007 = vpop.f32.mrb[0].mxu0
      %1008 = vmatprep.mubr.bf16.mxu0 0
      %1009 = vmatmul.mubr.bf16.gmra.mrb[0].mxu0 %v585
      %v1010 = vpop.f32.mrb[0].mxu0
      %v1011 = vadd.f32 %v455, %v1010
      %v1012 = vpop.f32.mrb[0].mxu0
      %v1013 = vpop.f32.mrb[0].mxu0
      %v1014 = vadd.f32 %v455, %v1013
      %v1015 = vpop.f32.mrb[0].mxu0
      %1016 = vmatprep.mubr.bf16.mxu0 0
      %1017 = vmatmul.mubr.bf16.gmra.mrb[0].mxu0 %v588
      %v1018 = vpop.f32.mrb[0].mxu0
      %v1019 = vadd.f32 %v455, %v1018
      %v1020 = vpop.f32.mrb[0].mxu0
      %v1021 = vpop.f32.mrb[0].mxu0
      %v1022 = vadd.f32 %v455, %v1021
      %v1023 = vpop.f32.mrb[0].mxu0
      %1024 = vmatprep.mubr.bf16.mxu0 0
      %1025 = vmatmul.mubr.bf16.gmra.mrb[0].mxu0 %v591
      %v1026 = vpop.f32.mrb[0].mxu0
      %v1027 = vadd.f32 %v455, %v1026
      %v1028 = vpop.f32.mrb[0].mxu0
      %v1029 = vpop.f32.mrb[0].mxu0
      %v1030 = vadd.f32 %v455, %v1029
      %v1031 = vpop.f32.mrb[0].mxu0
      %1032 = vmatprep.mubr.bf16.mxu0 0
      %1033 = vmatmul.mubr.bf16.gmra.mrb[0].mxu0 %v594
      %v1034 = vpop.f32.mrb[0].mxu0
      %v1035 = vadd.f32 %v455, %v1034
      %v1036 = vpop.f32.mrb[0].mxu0
      %v1037 = vpop.f32.mrb[0].mxu0
      %v1038 = vadd.f32 %v455, %v1037
      %v1039 = vpop.f32.mrb[0].mxu0
      %1040 = vmatprep.mubr.bf16.mxu0 0
      %1041 = vmatmul.mubr.bf16.gmra.mrb[0].mxu0 %v597
      %v1042 = vpop.f32.mrb[0].mxu0
      %v1043 = vadd.f32 %v455, %v1042
      %v1044 = vpop.f32.mrb[0].mxu0
      %v1045 = vpop.f32.mrb[0].mxu0
      %v1046 = vadd.f32 %v455, %v1045
      %v1047 = vpop.f32.mrb[0].mxu0
      %1048 = vmatprep.mubr.bf16.mxu0 0
      %1049 = vmatmul.mubr.bf16.gmra.mrb[0].mxu0 %v600
      %v1050 = vpop.f32.mrb[0].mxu0
      %v1051 = vadd.f32 %v455, %v1050
      %v1052 = vpop.f32.mrb[0].mxu0
      %v1053 = vpop.f32.mrb[0].mxu0
      %v1054 = vadd.f32 %v455, %v1053
      %v1055 = vpop.f32.mrb[0].mxu0
      %1056 = vmatprep.mubr.bf16.mxu0 0
      %1057 = vmatmul.mubr.bf16.gmra.mrb[0].mxu0 %v603
      %v1058 = vpop.f32.mrb[0].mxu0
      %v1059 = vadd.f32 %v455, %v1058
      %v1060 = vpop.f32.mrb[0].mxu0
      %v1061 = vpop.f32.mrb[0].mxu0
      %v1062 = vadd.f32 %v455, %v1061
      %v1063 = vpop.f32.mrb[0].mxu0
      %1064 = vmatprep.mubr.bf16.mxu0 0
      %1065 = vmatmul.mubr.bf16.gmra.mrb[0].mxu0 %v606
      %v1066 = vpop.f32.mrb[0].mxu0
      %v1067 = vadd.f32 %v455, %v1066
      %v1068 = vpop.f32.mrb[0].mxu0
      %v1069 = vpop.f32.mrb[0].mxu0
      %v1070 = vadd.f32 %v455, %v1069
      %v1071 = vpop.f32.mrb[0].mxu0
      %1072 = vmatprep.mubr.bf16.mxu0 0
      %1073 = vmatmul.mubr.bf16.gmra.mrb[0].mxu0 %v609
      %v1074 = vpop.f32.mrb[0].mxu0
      %v1075 = vadd.f32 %v455, %v1074
      %v1076 = vpop.f32.mrb[0].mxu0
      %v1077 = vpop.f32.mrb[0].mxu0
      %v1078 = vadd.f32 %v455, %v1077
      %v1079 = vpop.f32.mrb[0].mxu0
      %1080 = vmatprep.mubr.bf16.mxu0 0
      %1081 = vmatmul.mubr.bf16.gmra.mrb[0].mxu0 %v612
      %v1082 = vpop.f32.mrb[0].mxu0
      %v1083 = vadd.f32 %v455, %v1082
      %v1084 = vpop.f32.mrb[0].mxu0
      %v1085 = vpop.f32.mrb[0].mxu0
      %v1086 = vadd.f32 %v455, %v1085
      %v1087 = vpop.f32.mrb[0].mxu0
      %1088 = vmatprep.mubr.bf16.mxu0 0
      %1089 = vmatmul.mubr.bf16.gmra.mrb[0].mxu0 %v615
      %v1090 = vpop.f32.mrb[0].mxu0
      %v1091 = vadd.f32 %v455, %v1090
      %v1092 = vpop.f32.mrb[0].mxu0
      %v1093 = vpop.f32.mrb[0].mxu0
      %v1094 = vadd.f32 %v455, %v1093
      %v1095 = vpop.f32.mrb[0].mxu0
      %1096 = vmatprep.mubr.bf16.mxu0 0
      %1097 = vmatmul.mubr.bf16.gmra.mrb[0].mxu0 %v618
      %v1098 = vpop.f32.mrb[0].mxu0
      %v1099 = vadd.f32 %v455, %v1098
      %v1100 = vpop.f32.mrb[0].mxu0
      %v1101 = vpop.f32.mrb[0].mxu0
      %v1102 = vadd.f32 %v455, %v1101
      %v1103 = vpop.f32.mrb[0].mxu0
      %1104 = vmatprep.mubr.bf16.mxu0 0
      %1105 = vmatmul.mubr.bf16.gmra.mrb[0].mxu0 %v621
      %v1106 = vpop.f32.mrb[0].mxu0
      %v1107 = vadd.f32 %v455, %v1106
      %v1108 = vpop.f32.mrb[0].mxu0
      %v1109 = vpop.f32.mrb[0].mxu0
      %v1110 = vadd.f32 %v455, %v1109
      %v1111 = vpop.f32.mrb[0].mxu0
      %1112 = vmatprep.mubr.bf16.mxu0 0
      %1113 = vmatmul.mubr.bf16.gmra.mrb[0].mxu0 %v624
      %v1114 = vpop.f32.mrb[0].mxu0
      %v1115 = vadd.f32 %v455, %v1114
      %v1116 = vpop.f32.mrb[0].mxu0
      %v1117 = vpop.f32.mrb[0].mxu0
      %v1118 = vadd.f32 %v455, %v1117
      %v1119 = vpop.f32.mrb[0].mxu0
      %1120 = vmatprep.mubr.bf16.mxu0 0
      %1121 = vmatmul.mubr.bf16.gmra.mrb[0].mxu0 %v627
      %v1122 = vpop.f32.mrb[0].mxu0
      %v1123 = vadd.f32 %v455, %v1122
      %v1124 = vpop.f32.mrb[0].mxu0
      %v1125 = vpop.f32.mrb[0].mxu0
      %v1126 = vadd.f32 %v455, %v1125
      %v1127 = vpop.f32.mrb[0].mxu0
      %1128 = vmatprep.mubr.bf16.mxu0 0
      %1129 = vmatmul.mubr.bf16.gmra.mrb[0].mxu0 %v630
      %v1130 = vpop.f32.mrb[0].mxu0
      %v1131 = vadd.f32 %v455, %v1130
      %v1132 = vpop.f32.mrb[0].mxu0
      %v1133 = vpop.f32.mrb[0].mxu0
      %v1134 = vadd.f32 %v455, %v1133
      %v1135 = vpop.f32.mrb[0].mxu0
      %1136 = vmatprep.mubr.bf16.mxu0 0
      %1137 = vmatmul.mubr.bf16.gmra.mrb[0].mxu0 %v633
      %v1138 = vpop.f32.mrb[0].mxu0
      %v1139 = vadd.f32 %v455, %v1138
      %v1140 = vpop.f32.mrb[0].mxu0
      %v1141 = vpop.f32.mrb[0].mxu0
      %v1142 = vadd.f32 %v455, %v1141
      %v1143 = vpop.f32.mrb[0].mxu0
      %1144 = vmatprep.mubr.bf16.mxu0 0
      %1145 = vmatmul.mubr.bf16.gmra.mrb[0].mxu0 %v636
      %v1146 = vpop.f32.mrb[0].mxu0
      %v1147 = vadd.f32 %v455, %v1146
      %v1148 = vpop.f32.mrb[0].mxu0
      %v1149 = vpop.f32.mrb[0].mxu0
      %v1150 = vadd.f32 %v455, %v1149
      %v1151 = vpop.f32.mrb[0].mxu0
      %1152 = vmatprep.mubr.bf16.mxu0 0
      %1153 = vmatmul.mubr.bf16.gmra.mrb[0].mxu0 %v639
      %v1154 = vpop.f32.mrb[0].mxu0
      %v1155 = vadd.f32 %v455, %v1154
      %v1156 = vpop.f32.mrb[0].mxu0
      %v1157 = vpop.f32.mrb[0].mxu0
      %v1158 = vadd.f32 %v455, %v1157
      %v1159 = vpop.f32.mrb[0].mxu0
      %1160 = vmatprep.mubr.bf16.mxu0 0
      %1161 = vmatmul.mubr.bf16.gmra.mrb[0].mxu0 %v642
      %v1162 = vpop.f32.mrb[0].mxu0
      %v1163 = vadd.f32 %v455, %v1162
      %v1164 = vpop.f32.mrb[0].mxu0
      %v1165 = vpop.f32.mrb[0].mxu0
      %v1166 = vadd.f32 %v455, %v1165
      %v1167 = vpop.f32.mrb[0].mxu0
      %1168 = vmatprep.mubr.bf16.mxu0 0
      %1169 = vmatmul.mubr.bf16.gmra.mrb[0].mxu0 %v645
      %v1170 = vpop.f32.mrb[0].mxu0
      %v1171 = vadd.f32 %v455, %v1170
      %v1172 = vpop.f32.mrb[0].mxu0
      %v1173 = vpop.f32.mrb[0].mxu0
      %v1174 = vadd.f32 %v455, %v1173
      %v1175 = vpop.f32.mrb[0].mxu0
      %1176 = vmatprep.mubr.bf16.mxu0 0
      %1177 = vmatmul.mubr.bf16.gmra.mrb[0].mxu0 %v648
      %v1178 = vpop.f32.mrb[0].mxu0
      %v1179 = vadd.f32 %v455, %v1178
      %v1180 = vpop.f32.mrb[0].mxu0
      %v1181 = vpop.f32.mrb[0].mxu0
      %v1182 = vadd.f32 %v455, %v1181
      %v1183 = vpop.f32.mrb[0].mxu0
      %1184 = vmatprep.mubr.bf16.mxu0 0
      %1185 = vmatmul.mubr.bf16.gmra.mrb[0].mxu0 %v651
      %v1186 = vpop.f32.mrb[0].mxu0
      %v1187 = vadd.f32 %v455, %v1186
      %v1188 = vpop.f32.mrb[0].mxu0
      %v1189 = vpop.f32.mrb[0].mxu0
      %v1190 = vadd.f32 %v455, %v1189
      %v1191 = vpop.f32.mrb[0].mxu0
      %1192 = vmatprep.mubr.bf16.mxu0 0
      %1193 = vmatmul.mubr.bf16.gmra.mrb[0].mxu0 %v654
      %v1194 = vpop.f32.mrb[0].mxu0
      %v1195 = vadd.f32 %v455, %v1194
      %v1196 = vpop.f32.mrb[0].mxu0
      %v1197 = vpop.f32.mrb[0].mxu0
      %v1198 = vadd.f32 %v455, %v1197
      %v1199 = vpop.f32.mrb[0].mxu0
      %1200 = vdwg.mxu0
      %v1201 = vmax.f32 %v691, 0.0
      %v1202 = vmax.f32 %v694, 0.0
      %v1203 = vmax.f32 %v699, 0.0
      %v1204 = vmax.f32 %v702, 0.0
      %v1205 = vmax.f32 %v707, 0.0
      %v1206 = vmax.f32 %v710, 0.0
      %v1207 = vmax.f32 %v715, 0.0
      %v1208 = vmax.f32 %v718, 0.0
      %v1209 = vmax.f32 %v723, 0.0
      %v1210 = vmax.f32 %v726, 0.0
      %v1211 = vmax.f32 %v731, 0.0
      %v1212 = vmax.f32 %v734, 0.0
      %v1213 = vmax.f32 %v739, 0.0
      %v1214 = vmax.f32 %v742, 0.0
      %v1215 = vmax.f32 %v747, 0.0
      %v1216 = vmax.f32 %v750, 0.0
      %v1217 = vmax.f32 %v755, 0.0
      %v1218 = vmax.f32 %v758, 0.0
      %v1219 = vmax.f32 %v763, 0.0
      %v1220 = vmax.f32 %v766, 0.0
      %v1221 = vmax.f32 %v771, 0.0
      %v1222 = vmax.f32 %v774, 0.0
      %v1223 = vmax.f32 %v779, 0.0
      %v1224 = vmax.f32 %v782, 0.0
      %v1225 = vmax.f32 %v787, 0.0
      %v1226 = vmax.f32 %v790, 0.0
      %v1227 = vmax.f32 %v795, 0.0
      %v1228 = vmax.f32 %v798, 0.0
      %v1229 = vmax.f32 %v803, 0.0
      %v1230 = vmax.f32 %v806, 0.0
      %v1231 = vmax.f32 %v811, 0.0
      %v1232 = vmax.f32 %v814, 0.0
      %v1233 = vmax.f32 %v819, 0.0
      %v1234 = vmax.f32 %v822, 0.0
      %v1235 = vmax.f32 %v827, 0.0
      %v1236 = vmax.f32 %v830, 0.0
      %v1237 = vmax.f32 %v835, 0.0
      %v1238 = vmax.f32 %v838, 0.0
      %v1239 = vmax.f32 %v843, 0.0
      %v1240 = vmax.f32 %v846, 0.0
      %v1241 = vmax.f32 %v851, 0.0
      %v1242 = vmax.f32 %v854, 0.0
      %v1243 = vmax.f32 %v859, 0.0
      %v1244 = vmax.f32 %v862, 0.0
      %v1245 = vmax.f32 %v867, 0.0
      %v1246 = vmax.f32 %v870, 0.0
      %v1247 = vmax.f32 %v875, 0.0
      %v1248 = vmax.f32 %v878, 0.0
      %v1249 = vmax.f32 %v883, 0.0
      %v1250 = vmax.f32 %v886, 0.0
      %v1251 = vmax.f32 %v891, 0.0
      %v1252 = vmax.f32 %v894, 0.0
      %v1253 = vmax.f32 %v899, 0.0
      %v1254 = vmax.f32 %v902, 0.0
      %v1255 = vmax.f32 %v907, 0.0
      %v1256 = vmax.f32 %v910, 0.0
      %v1257 = vmax.f32 %v915, 0.0
      %v1258 = vmax.f32 %v918, 0.0
      %v1259 = vmax.f32 %v923, 0.0
      %v1260 = vmax.f32 %v926, 0.0
      %v1261 = vmax.f32 %v931, 0.0
      %v1262 = vmax.f32 %v934, 0.0
      %v1263 = vmax.f32 %v939, 0.0
      %v1264 = vmax.f32 %v942, 0.0
      %v1265 = vmax.f32 %v947, 0.0
      %v1266 = vmax.f32 %v950, 0.0
      %v1267 = vmax.f32 %v955, 0.0
      %v1268 = vmax.f32 %v958, 0.0
      %v1269 = vmax.f32 %v963, 0.0
      %v1270 = vmax.f32 %v966, 0.0
      %v1271 = vmax.f32 %v971, 0.0
      %v1272 = vmax.f32 %v974, 0.0
      %v1273 = vmax.f32 %v979, 0.0
      %v1274 = vmax.f32 %v982, 0.0
      %v1275 = vmax.f32 %v987, 0.0
      %v1276 = vmax.f32 %v990, 0.0
      %v1277 = vmax.f32 %v995, 0.0
      %v1278 = vmax.f32 %v998, 0.0
      %v1279 = vmax.f32 %v1003, 0.0
      %v1280 = vmax.f32 %v1006, 0.0
      %v1281 = vmax.f32 %v1011, 0.0
      %v1282 = vmax.f32 %v1014, 0.0
      %v1283 = vmax.f32 %v1019, 0.0
      %v1284 = vmax.f32 %v1022, 0.0
      %v1285 = vmax.f32 %v1027, 0.0
      %v1286 = vmax.f32 %v1030, 0.0
      %v1287 = vmax.f32 %v1035, 0.0
      %v1288 = vmax.f32 %v1038, 0.0
      %v1289 = vmax.f32 %v1043, 0.0
      %v1290 = vmax.f32 %v1046, 0.0
      %v1291 = vmax.f32 %v1051, 0.0
      %v1292 = vmax.f32 %v1054, 0.0
      %v1293 = vmax.f32 %v1059, 0.0
      %v1294 = vmax.f32 %v1062, 0.0
      %v1295 = vmax.f32 %v1067, 0.0
      %v1296 = vmax.f32 %v1070, 0.0
      %v1297 = vmax.f32 %v1075, 0.0
      %v1298 = vmax.f32 %v1078, 0.0
      %v1299 = vmax.f32 %v1083, 0.0
      %v1300 = vmax.f32 %v1086, 0.0
      %v1301 = vmax.f32 %v1091, 0.0
      %v1302 = vmax.f32 %v1094, 0.0
      %v1303 = vmax.f32 %v1099, 0.0
      %v1304 = vmax.f32 %v1102, 0.0
      %v1305 = vmax.f32 %v1107, 0.0
      %v1306 = vmax.f32 %v1110, 0.0
      %v1307 = vmax.f32 %v1115, 0.0
      %v1308 = vmax.f32 %v1118, 0.0
      %v1309 = vmax.f32 %v1123, 0.0
      %v1310 = vmax.f32 %v1126, 0.0
      %v1311 = vmax.f32 %v1131, 0.0
      %v1312 = vmax.f32 %v1134, 0.0
      %v1313 = vmax.f32 %v1139, 0.0
      %v1314 = vmax.f32 %v1142, 0.0
      %v1315 = vmax.f32 %v1147, 0.0
      %v1316 = vmax.f32 %v1150, 0.0
      %v1317 = vmax.f32 %v1155, 0.0
      %v1318 = vmax.f32 %v1158, 0.0
      %v1319 = vmax.f32 %v1163, 0.0
      %v1320 = vmax.f32 %v1166, 0.0
      %v1321 = vmax.f32 %v1171, 0.0
      %v1322 = vmax.f32 %v1174, 0.0
      %v1323 = vmax.f32 %v1179, 0.0
      %v1324 = vmax.f32 %v1182, 0.0
      %v1325 = vmax.f32 %v1187, 0.0
      %v1326 = vmax.f32 %v1190, 0.0
      %v1327 = vmax.f32 %v1195, 0.0
      %v1328 = vmax.f32 %v1198, 0.0
      %v1329 = vpack.c.bf16 %v1202, %v1201
      %v1330 = vpack.c.bf16 %v1204, %v1203
      %v1331 = vpack.c.bf16 %v1206, %v1205
      %v1332 = vpack.c.bf16 %v1208, %v1207
      %v1333 = vpack.c.bf16 %v1210, %v1209
      %v1334 = vpack.c.bf16 %v1212, %v1211
      %v1335 = vpack.c.bf16 %v1214, %v1213
      %v1336 = vpack.c.bf16 %v1216, %v1215
      %v1337 = vpack.c.bf16 %v1218, %v1217
      %v1338 = vpack.c.bf16 %v1220, %v1219
      %v1339 = vpack.c.bf16 %v1222, %v1221
      %v1340 = vpack.c.bf16 %v1224, %v1223
      %v1341 = vpack.c.bf16 %v1226, %v1225
      %v1342 = vpack.c.bf16 %v1228, %v1227
      %v1343 = vpack.c.bf16 %v1230, %v1229
      %v1344 = vpack.c.bf16 %v1232, %v1231
      %v1345 = vpack.c.bf16 %v1234, %v1233
      %v1346 = vpack.c.bf16 %v1236, %v1235
      %v1347 = vpack.c.bf16 %v1238, %v1237
      %v1348 = vpack.c.bf16 %v1240, %v1239
      %v1349 = vpack.c.bf16 %v1242, %v1241
      %v1350 = vpack.c.bf16 %v1244, %v1243
      %v1351 = vpack.c.bf16 %v1246, %v1245
      %v1352 = vpack.c.bf16 %v1248, %v1247
      %v1353 = vpack.c.bf16 %v1250, %v1249
      %v1354 = vpack.c.bf16 %v1252, %v1251
      %v1355 = vpack.c.bf16 %v1254, %v1253
      %v1356 = vpack.c.bf16 %v1256, %v1255
      %v1357 = vpack.c.bf16 %v1258, %v1257
      %v1358 = vpack.c.bf16 %v1260, %v1259
      %v1359 = vpack.c.bf16 %v1262, %v1261
      %v1360 = vpack.c.bf16 %v1264, %v1263
      %v1361 = vpack.c.bf16 %v1266, %v1265
      %v1362 = vpack.c.bf16 %v1268, %v1267
      %v1363 = vpack.c.bf16 %v1270, %v1269
      %v1364 = vpack.c.bf16 %v1272, %v1271
      %v1365 = vpack.c.bf16 %v1274, %v1273
      %v1366 = vpack.c.bf16 %v1276, %v1275
      %v1367 = vpack.c.bf16 %v1278, %v1277
      %v1368 = vpack.c.bf16 %v1280, %v1279
      %v1369 = vpack.c.bf16 %v1282, %v1281
      %v1370 = vpack.c.bf16 %v1284, %v1283
      %v1371 = vpack.c.bf16 %v1286, %v1285
      %v1372 = vpack.c.bf16 %v1288, %v1287
      %v1373 = vpack.c.bf16 %v1290, %v1289
      %v1374 = vpack.c.bf16 %v1292, %v1291
      %v1375 = vpack.c.bf16 %v1294, %v1293
      %v1376 = vpack.c.bf16 %v1296, %v1295
      %v1377 = vpack.c.bf16 %v1298, %v1297
      %v1378 = vpack.c.bf16 %v1300, %v1299
      %v1379 = vpack.c.bf16 %v1302, %v1301
      %v1380 = vpack.c.bf16 %v1304, %v1303
      %v1381 = vpack.c.bf16 %v1306, %v1305
      %v1382 = vpack.c.bf16 %v1308, %v1307
      %v1383 = vpack.c.bf16 %v1310, %v1309
      %v1384 = vpack.c.bf16 %v1312, %v1311
      %v1385 = vpack.c.bf16 %v1314, %v1313
      %v1386 = vpack.c.bf16 %v1316, %v1315
      %v1387 = vpack.c.bf16 %v1318, %v1317
      %v1388 = vpack.c.bf16 %v1320, %v1319
      %v1389 = vpack.c.bf16 %v1322, %v1321
      %v1390 = vpack.c.bf16 %v1324, %v1323
      %v1391 = vpack.c.bf16 %v1326, %v1325
      %v1392 = vpack.c.bf16 %v1328, %v1327
      %v1393 = vld [vmem:[%s3] sm:$0xf]
      %v1394 = vld [vmem:[%s3 + $0x4] sm:$0xf]
      %v1395 = vld [vmem:[%s3 + $0x8] sm:$0xf]
      %v1396 = vld [vmem:[%s3 + $0xc] sm:$0xf]
      %v1397 = vld [vmem:[%s3 + $0x10] sm:$0xf]
      %v1398 = vld [vmem:[%s3 + $0x14] sm:$0xf]
      %v1399 = vld [vmem:[%s3 + $0x18] sm:$0xf]
      %v1400 = vld [vmem:[%s3 + $0x1c] sm:$0xf]
      %v1401 = vld [vmem:[%s3 + $0x20] sm:$0xf]
      %v1402 = vld [vmem:[%s3 + $0x24] sm:$0xf]
      %v1403 = vld [vmem:[%s3 + $0x28] sm:$0xf]
      %v1404 = vld [vmem:[%s3 + $0x2c] sm:$0xf]
      %v1405 = vld [vmem:[%s3 + $0x30] sm:$0xf]
      %v1406 = vld [vmem:[%s3 + $0x34] sm:$0xf]
      %v1407 = vld [vmem:[%s3 + $0x38] sm:$0xf]
      %v1408 = vld [vmem:[%s3 + $0x3c] sm:$0xf]
      %v1409 = vld [vmem:[%s4] sm:$0x1]
      %v1411 = vlaneseq
      %v1412 = vshrl.u32 %v1411, 7
      %v1413 = vsub.s32 0, %v1412
      %v1414 = vrot.slane %v1409, %v1413
      %v1432 = vunpack.c.l.b16 %v1393
      %v1433 = vunpack.c.l.b16 %v1394
      %v1434 = vunpack.c.l.b16 %v1395
      %v1435 = vunpack.c.l.b16 %v1396
      %v1436 = vunpack.c.l.b16 %v1397
      %v1437 = vunpack.c.l.b16 %v1398
      %v1438 = vunpack.c.l.b16 %v1399
      %v1439 = vunpack.c.l.b16 %v1400
      %v1440 = vunpack.c.l.b16 %v1401
      %v1441 = vunpack.c.l.b16 %v1402
      %v1442 = vunpack.c.l.b16 %v1403
      %v1443 = vunpack.c.l.b16 %v1404
      %v1444 = vunpack.c.l.b16 %v1405
      %v1445 = vunpack.c.l.b16 %v1406
      %v1446 = vunpack.c.l.b16 %v1407
      %v1447 = vunpack.c.l.b16 %v1408
      %v1448 = vpack.c.b16 %v1433, %v1432
      %v1449 = vpack.c.b16 %v1435, %v1434
      %v1450 = vpack.c.b16 %v1437, %v1436
      %v1451 = vpack.c.b16 %v1439, %v1438
      %v1452 = vpack.c.b16 %v1441, %v1440
      %v1453 = vpack.c.b16 %v1443, %v1442
      %v1454 = vpack.c.b16 %v1445, %v1444
      %v1455 = vpack.c.b16 %v1447, %v1446
      %1464 = vmatprep.subr.bf16.mxu0 0
      %1465 = vmatpush1.bf16.msra.mxu0 %v1448
      %1466 = vmatprep.subr.bf16.mxu0 0
      %1467 = vmatpush1.bf16.msra.mxu0 %v1449
      %1468 = vmatprep.subr.bf16.mxu0 0
      %1469 = vmatpush1.bf16.msra.mxu0 %v1450
      %1470 = vmatprep.subr.bf16.mxu0 0
      %1471 = vmatpush1.bf16.msra.mxu0 %v1451
      %1472 = vmatprep.subr.bf16.mxu0 0
      %1473 = vmatpush1.bf16.msra.mxu0 %v1452
      %1474 = vmatprep.subr.bf16.mxu0 0
      %1475 = vmatpush1.bf16.msra.mxu0 %v1453
      %1476 = vmatprep.subr.bf16.mxu0 0
      %1477 = vmatpush1.bf16.msra.mxu0 %v1454
      %1478 = vmatprep.subr.bf16.mxu0 0
      %1479 = vmatpush1.bf16.msra.mxu0 %v1455
      %1480 = vmatprep.subr.bf16.mxu0 0
      %1481 = vmatpush1.bf16.msra.mxu0 0
      %1482 = vmatprep.subr.bf16.mxu0 0
      %1483 = vmatpush1.bf16.msra.mxu0 0
      %1484 = vmatprep.subr.bf16.mxu0 0
      %1485 = vmatpush1.bf16.msra.mxu0 0
      %1486 = vmatprep.subr.bf16.mxu0 0
      %1487 = vmatpush1.bf16.msra.mxu0 0
      %1488 = vmatprep.subr.bf16.mxu0 0
      %1489 = vmatpush1.bf16.msra.mxu0 0
      %1490 = vmatprep.subr.bf16.mxu0 0
      %1491 = vmatpush1.bf16.msra.mxu0 0
      %1492 = vmatprep.subr.bf16.mxu0 0
      %1493 = vmatpush1.bf16.msra.mxu0 0
      %1494 = vmatprep.subr.bf16.mxu0 0
      %1495 = vmatpush1.bf16.msra.mxu0 0
      %1496 = vmatprep.mubr.bf16.mxu0 0
      %1497 = vmatmul.mubr.bf16.gmra.mrb[0].mxu0 %v1329
      %v1498 = vpop.f32.mrb[0].mxu0
      %v1499 = vadd.f32 %v1414, %v1498
      %v1500 = vpop.f32.mrb[0].mxu0
      %v1501 = vpop.f32.mrb[0].mxu0
      %v1502 = vadd.f32 %v1414, %v1501
      %v1503 = vpop.f32.mrb[0].mxu0
      %1504 = vmatprep.mubr.bf16.mxu0 0
      %1505 = vmatmul.mubr.bf16.gmra.mrb[0].mxu0 %v1330
      %v1506 = vpop.f32.mrb[0].mxu0
      %v1507 = vadd.f32 %v1414, %v1506
      %v1508 = vpop.f32.mrb[0].mxu0
      %v1509 = vpop.f32.mrb[0].mxu0
      %v1510 = vadd.f32 %v1414, %v1509
      %v1511 = vpop.f32.mrb[0].mxu0
      %1512 = vmatprep.mubr.bf16.mxu0 0
      %1513 = vmatmul.mubr.bf16.gmra.mrb[0].mxu0 %v1331
      %v1514 = vpop.f32.mrb[0].mxu0
      %v1515 = vadd.f32 %v1414, %v1514
      %v1516 = vpop.f32.mrb[0].mxu0
      %v1517 = vpop.f32.mrb[0].mxu0
      %v1518 = vadd.f32 %v1414, %v1517
      %v1519 = vpop.f32.mrb[0].mxu0
      %1520 = vmatprep.mubr.bf16.mxu0 0
      %1521 = vmatmul.mubr.bf16.gmra.mrb[0].mxu0 %v1332
      %v1522 = vpop.f32.mrb[0].mxu0
      %v1523 = vadd.f32 %v1414, %v1522
      %v1524 = vpop.f32.mrb[0].mxu0
      %v1525 = vpop.f32.mrb[0].mxu0
      %v1526 = vadd.f32 %v1414, %v1525
      %v1527 = vpop.f32.mrb[0].mxu0
      %1528 = vmatprep.mubr.bf16.mxu0 0
      %1529 = vmatmul.mubr.bf16.gmra.mrb[0].mxu0 %v1333
      %v1530 = vpop.f32.mrb[0].mxu0
      %v1531 = vadd.f32 %v1414, %v1530
      %v1532 = vpop.f32.mrb[0].mxu0
      %v1533 = vpop.f32.mrb[0].mxu0
      %v1534 = vadd.f32 %v1414, %v1533
      %v1535 = vpop.f32.mrb[0].mxu0
      %1536 = vmatprep.mubr.bf16.mxu0 0
      %1537 = vmatmul.mubr.bf16.gmra.mrb[0].mxu0 %v1334
      %v1538 = vpop.f32.mrb[0].mxu0
      %v1539 = vadd.f32 %v1414, %v1538
      %v1540 = vpop.f32.mrb[0].mxu0
      %v1541 = vpop.f32.mrb[0].mxu0
      %v1542 = vadd.f32 %v1414, %v1541
      %v1543 = vpop.f32.mrb[0].mxu0
      %1544 = vmatprep.mubr.bf16.mxu0 0
      %1545 = vmatmul.mubr.bf16.gmra.mrb[0].mxu0 %v1335
      %v1546 = vpop.f32.mrb[0].mxu0
      %v1547 = vadd.f32 %v1414, %v1546
      %v1548 = vpop.f32.mrb[0].mxu0
      %v1549 = vpop.f32.mrb[0].mxu0
      %v1550 = vadd.f32 %v1414, %v1549
      %v1551 = vpop.f32.mrb[0].mxu0
      %1552 = vmatprep.mubr.bf16.mxu0 0
      %1553 = vmatmul.mubr.bf16.gmra.mrb[0].mxu0 %v1336
      %v1554 = vpop.f32.mrb[0].mxu0
      %v1555 = vadd.f32 %v1414, %v1554
      %v1556 = vpop.f32.mrb[0].mxu0
      %v1557 = vpop.f32.mrb[0].mxu0
      %v1558 = vadd.f32 %v1414, %v1557
      %v1559 = vpop.f32.mrb[0].mxu0
      %1560 = vmatprep.mubr.bf16.mxu0 0
      %1561 = vmatmul.mubr.bf16.gmra.mrb[0].mxu0 %v1337
      %v1562 = vpop.f32.mrb[0].mxu0
      %v1563 = vadd.f32 %v1414, %v1562
      %v1564 = vpop.f32.mrb[0].mxu0
      %v1565 = vpop.f32.mrb[0].mxu0
      %v1566 = vadd.f32 %v1414, %v1565
      %v1567 = vpop.f32.mrb[0].mxu0
      %1568 = vmatprep.mubr.bf16.mxu0 0
      %1569 = vmatmul.mubr.bf16.gmra.mrb[0].mxu0 %v1338
      %v1570 = vpop.f32.mrb[0].mxu0
      %v1571 = vadd.f32 %v1414, %v1570
      %v1572 = vpop.f32.mrb[0].mxu0
      %v1573 = vpop.f32.mrb[0].mxu0
      %v1574 = vadd.f32 %v1414, %v1573
      %v1575 = vpop.f32.mrb[0].mxu0
      %1576 = vmatprep.mubr.bf16.mxu0 0
      %1577 = vmatmul.mubr.bf16.gmra.mrb[0].mxu0 %v1339
      %v1578 = vpop.f32.mrb[0].mxu0
      %v1579 = vadd.f32 %v1414, %v1578
      %v1580 = vpop.f32.mrb[0].mxu0
      %v1581 = vpop.f32.mrb[0].mxu0
      %v1582 = vadd.f32 %v1414, %v1581
      %v1583 = vpop.f32.mrb[0].mxu0
      %1584 = vmatprep.mubr.bf16.mxu0 0
      %1585 = vmatmul.mubr.bf16.gmra.mrb[0].mxu0 %v1340
      %v1586 = vpop.f32.mrb[0].mxu0
      %v1587 = vadd.f32 %v1414, %v1586
      %v1588 = vpop.f32.mrb[0].mxu0
      %v1589 = vpop.f32.mrb[0].mxu0
      %v1590 = vadd.f32 %v1414, %v1589
      %v1591 = vpop.f32.mrb[0].mxu0
      %1592 = vmatprep.mubr.bf16.mxu0 0
      %1593 = vmatmul.mubr.bf16.gmra.mrb[0].mxu0 %v1341
      %v1594 = vpop.f32.mrb[0].mxu0
      %v1595 = vadd.f32 %v1414, %v1594
      %v1596 = vpop.f32.mrb[0].mxu0
      %v1597 = vpop.f32.mrb[0].mxu0
      %v1598 = vadd.f32 %v1414, %v1597
      %v1599 = vpop.f32.mrb[0].mxu0
      %1600 = vmatprep.mubr.bf16.mxu0 0
      %1601 = vmatmul.mubr.bf16.gmra.mrb[0].mxu0 %v1342
      %v1602 = vpop.f32.mrb[0].mxu0
      %v1603 = vadd.f32 %v1414, %v1602
      %v1604 = vpop.f32.mrb[0].mxu0
      %v1605 = vpop.f32.mrb[0].mxu0
      %v1606 = vadd.f32 %v1414, %v1605
      %v1607 = vpop.f32.mrb[0].mxu0
      %1608 = vmatprep.mubr.bf16.mxu0 0
      %1609 = vmatmul.mubr.bf16.gmra.mrb[0].mxu0 %v1343
      %v1610 = vpop.f32.mrb[0].mxu0
      %v1611 = vadd.f32 %v1414, %v1610
      %v1612 = vpop.f32.mrb[0].mxu0
      %v1613 = vpop.f32.mrb[0].mxu0
      %v1614 = vadd.f32 %v1414, %v1613
      %v1615 = vpop.f32.mrb[0].mxu0
      %1616 = vmatprep.mubr.bf16.mxu0 0
      %1617 = vmatmul.mubr.bf16.gmra.mrb[0].mxu0 %v1344
      %v1618 = vpop.f32.mrb[0].mxu0
      %v1619 = vadd.f32 %v1414, %v1618
      %v1620 = vpop.f32.mrb[0].mxu0
      %v1621 = vpop.f32.mrb[0].mxu0
      %v1622 = vadd.f32 %v1414, %v1621
      %v1623 = vpop.f32.mrb[0].mxu0
      %1624 = vmatprep.mubr.bf16.mxu0 0
      %1625 = vmatmul.mubr.bf16.gmra.mrb[0].mxu0 %v1345
      %v1626 = vpop.f32.mrb[0].mxu0
      %v1627 = vadd.f32 %v1414, %v1626
      %v1628 = vpop.f32.mrb[0].mxu0
      %v1629 = vpop.f32.mrb[0].mxu0
      %v1630 = vadd.f32 %v1414, %v1629
      %v1631 = vpop.f32.mrb[0].mxu0
      %1632 = vmatprep.mubr.bf16.mxu0 0
      %1633 = vmatmul.mubr.bf16.gmra.mrb[0].mxu0 %v1346
      %v1634 = vpop.f32.mrb[0].mxu0
      %v1635 = vadd.f32 %v1414, %v1634
      %v1636 = vpop.f32.mrb[0].mxu0
      %v1637 = vpop.f32.mrb[0].mxu0
      %v1638 = vadd.f32 %v1414, %v1637
      %v1639 = vpop.f32.mrb[0].mxu0
      %1640 = vmatprep.mubr.bf16.mxu0 0
      %1641 = vmatmul.mubr.bf16.gmra.mrb[0].mxu0 %v1347
      %v1642 = vpop.f32.mrb[0].mxu0
      %v1643 = vadd.f32 %v1414, %v1642
      %v1644 = vpop.f32.mrb[0].mxu0
      %v1645 = vpop.f32.mrb[0].mxu0
      %v1646 = vadd.f32 %v1414, %v1645
      %v1647 = vpop.f32.mrb[0].mxu0
      %1648 = vmatprep.mubr.bf16.mxu0 0
      %1649 = vmatmul.mubr.bf16.gmra.mrb[0].mxu0 %v1348
      %v1650 = vpop.f32.mrb[0].mxu0
      %v1651 = vadd.f32 %v1414, %v1650
      %v1652 = vpop.f32.mrb[0].mxu0
      %v1653 = vpop.f32.mrb[0].mxu0
      %v1654 = vadd.f32 %v1414, %v1653
      %v1655 = vpop.f32.mrb[0].mxu0
      %1656 = vmatprep.mubr.bf16.mxu0 0
      %1657 = vmatmul.mubr.bf16.gmra.mrb[0].mxu0 %v1349
      %v1658 = vpop.f32.mrb[0].mxu0
      %v1659 = vadd.f32 %v1414, %v1658
      %v1660 = vpop.f32.mrb[0].mxu0
      %v1661 = vpop.f32.mrb[0].mxu0
      %v1662 = vadd.f32 %v1414, %v1661
      %v1663 = vpop.f32.mrb[0].mxu0
      %1664 = vmatprep.mubr.bf16.mxu0 0
      %1665 = vmatmul.mubr.bf16.gmra.mrb[0].mxu0 %v1350
      %v1666 = vpop.f32.mrb[0].mxu0
      %v1667 = vadd.f32 %v1414, %v1666
      %v1668 = vpop.f32.mrb[0].mxu0
      %v1669 = vpop.f32.mrb[0].mxu0
      %v1670 = vadd.f32 %v1414, %v1669
      %v1671 = vpop.f32.mrb[0].mxu0
      %1672 = vmatprep.mubr.bf16.mxu0 0
      %1673 = vmatmul.mubr.bf16.gmra.mrb[0].mxu0 %v1351
      %v1674 = vpop.f32.mrb[0].mxu0
      %v1675 = vadd.f32 %v1414, %v1674
      %v1676 = vpop.f32.mrb[0].mxu0
      %v1677 = vpop.f32.mrb[0].mxu0
      %v1678 = vadd.f32 %v1414, %v1677
      %v1679 = vpop.f32.mrb[0].mxu0
      %1680 = vmatprep.mubr.bf16.mxu0 0
      %1681 = vmatmul.mubr.bf16.gmra.mrb[0].mxu0 %v1352
      %v1682 = vpop.f32.mrb[0].mxu0
      %v1683 = vadd.f32 %v1414, %v1682
      %v1684 = vpop.f32.mrb[0].mxu0
      %v1685 = vpop.f32.mrb[0].mxu0
      %v1686 = vadd.f32 %v1414, %v1685
      %v1687 = vpop.f32.mrb[0].mxu0
      %1688 = vmatprep.mubr.bf16.mxu0 0
      %1689 = vmatmul.mubr.bf16.gmra.mrb[0].mxu0 %v1353
      %v1690 = vpop.f32.mrb[0].mxu0
      %v1691 = vadd.f32 %v1414, %v1690
      %v1692 = vpop.f32.mrb[0].mxu0
      %v1693 = vpop.f32.mrb[0].mxu0
      %v1694 = vadd.f32 %v1414, %v1693
      %v1695 = vpop.f32.mrb[0].mxu0
      %1696 = vmatprep.mubr.bf16.mxu0 0
      %1697 = vmatmul.mubr.bf16.gmra.mrb[0].mxu0 %v1354
      %v1698 = vpop.f32.mrb[0].mxu0
      %v1699 = vadd.f32 %v1414, %v1698
      %v1700 = vpop.f32.mrb[0].mxu0
      %v1701 = vpop.f32.mrb[0].mxu0
      %v1702 = vadd.f32 %v1414, %v1701
      %v1703 = vpop.f32.mrb[0].mxu0
      %1704 = vmatprep.mubr.bf16.mxu0 0
      %1705 = vmatmul.mubr.bf16.gmra.mrb[0].mxu0 %v1355
      %v1706 = vpop.f32.mrb[0].mxu0
      %v1707 = vadd.f32 %v1414, %v1706
      %v1708 = vpop.f32.mrb[0].mxu0
      %v1709 = vpop.f32.mrb[0].mxu0
      %v1710 = vadd.f32 %v1414, %v1709
      %v1711 = vpop.f32.mrb[0].mxu0
      %1712 = vmatprep.mubr.bf16.mxu0 0
      %1713 = vmatmul.mubr.bf16.gmra.mrb[0].mxu0 %v1356
      %v1714 = vpop.f32.mrb[0].mxu0
      %v1715 = vadd.f32 %v1414, %v1714
      %v1716 = vpop.f32.mrb[0].mxu0
      %v1717 = vpop.f32.mrb[0].mxu0
      %v1718 = vadd.f32 %v1414, %v1717
      %v1719 = vpop.f32.mrb[0].mxu0
      %1720 = vmatprep.mubr.bf16.mxu0 0
      %1721 = vmatmul.mubr.bf16.gmra.mrb[0].mxu0 %v1357
      %v1722 = vpop.f32.mrb[0].mxu0
      %v1723 = vadd.f32 %v1414, %v1722
      %v1724 = vpop.f32.mrb[0].mxu0
      %v1725 = vpop.f32.mrb[0].mxu0
      %v1726 = vadd.f32 %v1414, %v1725
      %v1727 = vpop.f32.mrb[0].mxu0
      %1728 = vmatprep.mubr.bf16.mxu0 0
      %1729 = vmatmul.mubr.bf16.gmra.mrb[0].mxu0 %v1358
      %v1730 = vpop.f32.mrb[0].mxu0
      %v1731 = vadd.f32 %v1414, %v1730
      %v1732 = vpop.f32.mrb[0].mxu0
      %v1733 = vpop.f32.mrb[0].mxu0
      %v1734 = vadd.f32 %v1414, %v1733
      %v1735 = vpop.f32.mrb[0].mxu0
      %1736 = vmatprep.mubr.bf16.mxu0 0
      %1737 = vmatmul.mubr.bf16.gmra.mrb[0].mxu0 %v1359
      %v1738 = vpop.f32.mrb[0].mxu0
      %v1739 = vadd.f32 %v1414, %v1738
      %v1740 = vpop.f32.mrb[0].mxu0
      %v1741 = vpop.f32.mrb[0].mxu0
      %v1742 = vadd.f32 %v1414, %v1741
      %v1743 = vpop.f32.mrb[0].mxu0
      %1744 = vmatprep.mubr.bf16.mxu0 0
      %1745 = vmatmul.mubr.bf16.gmra.mrb[0].mxu0 %v1360
      %v1746 = vpop.f32.mrb[0].mxu0
      %v1747 = vadd.f32 %v1414, %v1746
      %v1748 = vpop.f32.mrb[0].mxu0
      %v1749 = vpop.f32.mrb[0].mxu0
      %v1750 = vadd.f32 %v1414, %v1749
      %v1751 = vpop.f32.mrb[0].mxu0
      %1752 = vmatprep.mubr.bf16.mxu0 0
      %1753 = vmatmul.mubr.bf16.gmra.mrb[0].mxu0 %v1361
      %v1754 = vpop.f32.mrb[0].mxu0
      %v1755 = vadd.f32 %v1414, %v1754
      %v1756 = vpop.f32.mrb[0].mxu0
      %v1757 = vpop.f32.mrb[0].mxu0
      %v1758 = vadd.f32 %v1414, %v1757
      %v1759 = vpop.f32.mrb[0].mxu0
      %1760 = vmatprep.mubr.bf16.mxu0 0
      %1761 = vmatmul.mubr.bf16.gmra.mrb[0].mxu0 %v1362
      %v1762 = vpop.f32.mrb[0].mxu0
      %v1763 = vadd.f32 %v1414, %v1762
      %v1764 = vpop.f32.mrb[0].mxu0
      %v1765 = vpop.f32.mrb[0].mxu0
      %v1766 = vadd.f32 %v1414, %v1765
      %v1767 = vpop.f32.mrb[0].mxu0
      %1768 = vmatprep.mubr.bf16.mxu0 0
      %1769 = vmatmul.mubr.bf16.gmra.mrb[0].mxu0 %v1363
      %v1770 = vpop.f32.mrb[0].mxu0
      %v1771 = vadd.f32 %v1414, %v1770
      %v1772 = vpop.f32.mrb[0].mxu0
      %v1773 = vpop.f32.mrb[0].mxu0
      %v1774 = vadd.f32 %v1414, %v1773
      %v1775 = vpop.f32.mrb[0].mxu0
      %1776 = vmatprep.mubr.bf16.mxu0 0
      %1777 = vmatmul.mubr.bf16.gmra.mrb[0].mxu0 %v1364
      %v1778 = vpop.f32.mrb[0].mxu0
      %v1779 = vadd.f32 %v1414, %v1778
      %v1780 = vpop.f32.mrb[0].mxu0
      %v1781 = vpop.f32.mrb[0].mxu0
      %v1782 = vadd.f32 %v1414, %v1781
      %v1783 = vpop.f32.mrb[0].mxu0
      %1784 = vmatprep.mubr.bf16.mxu0 0
      %1785 = vmatmul.mubr.bf16.gmra.mrb[0].mxu0 %v1365
      %v1786 = vpop.f32.mrb[0].mxu0
      %v1787 = vadd.f32 %v1414, %v1786
      %v1788 = vpop.f32.mrb[0].mxu0
      %v1789 = vpop.f32.mrb[0].mxu0
      %v1790 = vadd.f32 %v1414, %v1789
      %v1791 = vpop.f32.mrb[0].mxu0
      %1792 = vmatprep.mubr.bf16.mxu0 0
      %1793 = vmatmul.mubr.bf16.gmra.mrb[0].mxu0 %v1366
      %v1794 = vpop.f32.mrb[0].mxu0
      %v1795 = vadd.f32 %v1414, %v1794
      %v1796 = vpop.f32.mrb[0].mxu0
      %v1797 = vpop.f32.mrb[0].mxu0
      %v1798 = vadd.f32 %v1414, %v1797
      %v1799 = vpop.f32.mrb[0].mxu0
      %1800 = vmatprep.mubr.bf16.mxu0 0
      %1801 = vmatmul.mubr.bf16.gmra.mrb[0].mxu0 %v1367
      %v1802 = vpop.f32.mrb[0].mxu0
      %v1803 = vadd.f32 %v1414, %v1802
      %v1804 = vpop.f32.mrb[0].mxu0
      %v1805 = vpop.f32.mrb[0].mxu0
      %v1806 = vadd.f32 %v1414, %v1805
      %v1807 = vpop.f32.mrb[0].mxu0
      %1808 = vmatprep.mubr.bf16.mxu0 0
      %1809 = vmatmul.mubr.bf16.gmra.mrb[0].mxu0 %v1368
      %v1810 = vpop.f32.mrb[0].mxu0
      %v1811 = vadd.f32 %v1414, %v1810
      %v1812 = vpop.f32.mrb[0].mxu0
      %v1813 = vpop.f32.mrb[0].mxu0
      %v1814 = vadd.f32 %v1414, %v1813
      %v1815 = vpop.f32.mrb[0].mxu0
      %1816 = vmatprep.mubr.bf16.mxu0 0
      %1817 = vmatmul.mubr.bf16.gmra.mrb[0].mxu0 %v1369
      %v1818 = vpop.f32.mrb[0].mxu0
      %v1819 = vadd.f32 %v1414, %v1818
      %v1820 = vpop.f32.mrb[0].mxu0
      %v1821 = vpop.f32.mrb[0].mxu0
      %v1822 = vadd.f32 %v1414, %v1821
      %v1823 = vpop.f32.mrb[0].mxu0
      %1824 = vmatprep.mubr.bf16.mxu0 0
      %1825 = vmatmul.mubr.bf16.gmra.mrb[0].mxu0 %v1370
      %v1826 = vpop.f32.mrb[0].mxu0
      %v1827 = vadd.f32 %v1414, %v1826
      %v1828 = vpop.f32.mrb[0].mxu0
      %v1829 = vpop.f32.mrb[0].mxu0
      %v1830 = vadd.f32 %v1414, %v1829
      %v1831 = vpop.f32.mrb[0].mxu0
      %1832 = vmatprep.mubr.bf16.mxu0 0
      %1833 = vmatmul.mubr.bf16.gmra.mrb[0].mxu0 %v1371
      %v1834 = vpop.f32.mrb[0].mxu0
      %v1835 = vadd.f32 %v1414, %v1834
      %v1836 = vpop.f32.mrb[0].mxu0
      %v1837 = vpop.f32.mrb[0].mxu0
      %v1838 = vadd.f32 %v1414, %v1837
      %v1839 = vpop.f32.mrb[0].mxu0
      %1840 = vmatprep.mubr.bf16.mxu0 0
      %1841 = vmatmul.mubr.bf16.gmra.mrb[0].mxu0 %v1372
      %v1842 = vpop.f32.mrb[0].mxu0
      %v1843 = vadd.f32 %v1414, %v1842
      %v1844 = vpop.f32.mrb[0].mxu0
      %v1845 = vpop.f32.mrb[0].mxu0
      %v1846 = vadd.f32 %v1414, %v1845
      %v1847 = vpop.f32.mrb[0].mxu0
      %1848 = vmatprep.mubr.bf16.mxu0 0
      %1849 = vmatmul.mubr.bf16.gmra.mrb[0].mxu0 %v1373
      %v1850 = vpop.f32.mrb[0].mxu0
      %v1851 = vadd.f32 %v1414, %v1850
      %v1852 = vpop.f32.mrb[0].mxu0
      %v1853 = vpop.f32.mrb[0].mxu0
      %v1854 = vadd.f32 %v1414, %v1853
      %v1855 = vpop.f32.mrb[0].mxu0
      %1856 = vmatprep.mubr.bf16.mxu0 0
      %1857 = vmatmul.mubr.bf16.gmra.mrb[0].mxu0 %v1374
      %v1858 = vpop.f32.mrb[0].mxu0
      %v1859 = vadd.f32 %v1414, %v1858
      %v1860 = vpop.f32.mrb[0].mxu0
      %v1861 = vpop.f32.mrb[0].mxu0
      %v1862 = vadd.f32 %v1414, %v1861
      %v1863 = vpop.f32.mrb[0].mxu0
      %1864 = vmatprep.mubr.bf16.mxu0 0
      %1865 = vmatmul.mubr.bf16.gmra.mrb[0].mxu0 %v1375
      %v1866 = vpop.f32.mrb[0].mxu0
      %v1867 = vadd.f32 %v1414, %v1866
      %v1868 = vpop.f32.mrb[0].mxu0
      %v1869 = vpop.f32.mrb[0].mxu0
      %v1870 = vadd.f32 %v1414, %v1869
      %v1871 = vpop.f32.mrb[0].mxu0
      %1872 = vmatprep.mubr.bf16.mxu0 0
      %1873 = vmatmul.mubr.bf16.gmra.mrb[0].mxu0 %v1376
      %v1874 = vpop.f32.mrb[0].mxu0
      %v1875 = vadd.f32 %v1414, %v1874
      %v1876 = vpop.f32.mrb[0].mxu0
      %v1877 = vpop.f32.mrb[0].mxu0
      %v1878 = vadd.f32 %v1414, %v1877
      %v1879 = vpop.f32.mrb[0].mxu0
      %1880 = vmatprep.mubr.bf16.mxu0 0
      %1881 = vmatmul.mubr.bf16.gmra.mrb[0].mxu0 %v1377
      %v1882 = vpop.f32.mrb[0].mxu0
      %v1883 = vadd.f32 %v1414, %v1882
      %v1884 = vpop.f32.mrb[0].mxu0
      %v1885 = vpop.f32.mrb[0].mxu0
      %v1886 = vadd.f32 %v1414, %v1885
      %v1887 = vpop.f32.mrb[0].mxu0
      %1888 = vmatprep.mubr.bf16.mxu0 0
      %1889 = vmatmul.mubr.bf16.gmra.mrb[0].mxu0 %v1378
      %v1890 = vpop.f32.mrb[0].mxu0
      %v1891 = vadd.f32 %v1414, %v1890
      %v1892 = vpop.f32.mrb[0].mxu0
      %v1893 = vpop.f32.mrb[0].mxu0
      %v1894 = vadd.f32 %v1414, %v1893
      %v1895 = vpop.f32.mrb[0].mxu0
      %1896 = vmatprep.mubr.bf16.mxu0 0
      %1897 = vmatmul.mubr.bf16.gmra.mrb[0].mxu0 %v1379
      %v1898 = vpop.f32.mrb[0].mxu0
      %v1899 = vadd.f32 %v1414, %v1898
      %v1900 = vpop.f32.mrb[0].mxu0
      %v1901 = vpop.f32.mrb[0].mxu0
      %v1902 = vadd.f32 %v1414, %v1901
      %v1903 = vpop.f32.mrb[0].mxu0
      %1904 = vmatprep.mubr.bf16.mxu0 0
      %1905 = vmatmul.mubr.bf16.gmra.mrb[0].mxu0 %v1380
      %v1906 = vpop.f32.mrb[0].mxu0
      %v1907 = vadd.f32 %v1414, %v1906
      %v1908 = vpop.f32.mrb[0].mxu0
      %v1909 = vpop.f32.mrb[0].mxu0
      %v1910 = vadd.f32 %v1414, %v1909
      %v1911 = vpop.f32.mrb[0].mxu0
      %1912 = vmatprep.mubr.bf16.mxu0 0
      %1913 = vmatmul.mubr.bf16.gmra.mrb[0].mxu0 %v1381
      %v1914 = vpop.f32.mrb[0].mxu0
      %v1915 = vadd.f32 %v1414, %v1914
      %v1916 = vpop.f32.mrb[0].mxu0
      %v1917 = vpop.f32.mrb[0].mxu0
      %v1918 = vadd.f32 %v1414, %v1917
      %v1919 = vpop.f32.mrb[0].mxu0
      %1920 = vmatprep.mubr.bf16.mxu0 0
      %1921 = vmatmul.mubr.bf16.gmra.mrb[0].mxu0 %v1382
      %v1922 = vpop.f32.mrb[0].mxu0
      %v1923 = vadd.f32 %v1414, %v1922
      %v1924 = vpop.f32.mrb[0].mxu0
      %v1925 = vpop.f32.mrb[0].mxu0
      %v1926 = vadd.f32 %v1414, %v1925
      %v1927 = vpop.f32.mrb[0].mxu0
      %1928 = vmatprep.mubr.bf16.mxu0 0
      %1929 = vmatmul.mubr.bf16.gmra.mrb[0].mxu0 %v1383
      %v1930 = vpop.f32.mrb[0].mxu0
      %v1931 = vadd.f32 %v1414, %v1930
      %v1932 = vpop.f32.mrb[0].mxu0
      %v1933 = vpop.f32.mrb[0].mxu0
      %v1934 = vadd.f32 %v1414, %v1933
      %v1935 = vpop.f32.mrb[0].mxu0
      %1936 = vmatprep.mubr.bf16.mxu0 0
      %1937 = vmatmul.mubr.bf16.gmra.mrb[0].mxu0 %v1384
      %v1938 = vpop.f32.mrb[0].mxu0
      %v1939 = vadd.f32 %v1414, %v1938
      %v1940 = vpop.f32.mrb[0].mxu0
      %v1941 = vpop.f32.mrb[0].mxu0
      %v1942 = vadd.f32 %v1414, %v1941
      %v1943 = vpop.f32.mrb[0].mxu0
      %1944 = vmatprep.mubr.bf16.mxu0 0
      %1945 = vmatmul.mubr.bf16.gmra.mrb[0].mxu0 %v1385
      %v1946 = vpop.f32.mrb[0].mxu0
      %v1947 = vadd.f32 %v1414, %v1946
      %v1948 = vpop.f32.mrb[0].mxu0
      %v1949 = vpop.f32.mrb[0].mxu0
      %v1950 = vadd.f32 %v1414, %v1949
      %v1951 = vpop.f32.mrb[0].mxu0
      %1952 = vmatprep.mubr.bf16.mxu0 0
      %1953 = vmatmul.mubr.bf16.gmra.mrb[0].mxu0 %v1386
      %v1954 = vpop.f32.mrb[0].mxu0
      %v1955 = vadd.f32 %v1414, %v1954
      %v1956 = vpop.f32.mrb[0].mxu0
      %v1957 = vpop.f32.mrb[0].mxu0
      %v1958 = vadd.f32 %v1414, %v1957
      %v1959 = vpop.f32.mrb[0].mxu0
      %1960 = vmatprep.mubr.bf16.mxu0 0
      %1961 = vmatmul.mubr.bf16.gmra.mrb[0].mxu0 %v1387
      %v1962 = vpop.f32.mrb[0].mxu0
      %v1963 = vadd.f32 %v1414, %v1962
      %v1964 = vpop.f32.mrb[0].mxu0
      %v1965 = vpop.f32.mrb[0].mxu0
      %v1966 = vadd.f32 %v1414, %v1965
      %v1967 = vpop.f32.mrb[0].mxu0
      %1968 = vmatprep.mubr.bf16.mxu0 0
      %1969 = vmatmul.mubr.bf16.gmra.mrb[0].mxu0 %v1388
      %v1970 = vpop.f32.mrb[0].mxu0
      %v1971 = vadd.f32 %v1414, %v1970
      %v1972 = vpop.f32.mrb[0].mxu0
      %v1973 = vpop.f32.mrb[0].mxu0
      %v1974 = vadd.f32 %v1414, %v1973
      %v1975 = vpop.f32.mrb[0].mxu0
      %1976 = vmatprep.mubr.bf16.mxu0 0
      %1977 = vmatmul.mubr.bf16.gmra.mrb[0].mxu0 %v1389
      %v1978 = vpop.f32.mrb[0].mxu0
      %v1979 = vadd.f32 %v1414, %v1978
      %v1980 = vpop.f32.mrb[0].mxu0
      %v1981 = vpop.f32.mrb[0].mxu0
      %v1982 = vadd.f32 %v1414, %v1981
      %v1983 = vpop.f32.mrb[0].mxu0
      %1984 = vmatprep.mubr.bf16.mxu0 0
      %1985 = vmatmul.mubr.bf16.gmra.mrb[0].mxu0 %v1390
      %v1986 = vpop.f32.mrb[0].mxu0
      %v1987 = vadd.f32 %v1414, %v1986
      %v1988 = vpop.f32.mrb[0].mxu0
      %v1989 = vpop.f32.mrb[0].mxu0
      %v1990 = vadd.f32 %v1414, %v1989
      %v1991 = vpop.f32.mrb[0].mxu0
      %1992 = vmatprep.mubr.bf16.mxu0 0
      %1993 = vmatmul.mubr.bf16.gmra.mrb[0].mxu0 %v1391
      %v1994 = vpop.f32.mrb[0].mxu0
      %v1995 = vadd.f32 %v1414, %v1994
      %v1996 = vpop.f32.mrb[0].mxu0
      %v1997 = vpop.f32.mrb[0].mxu0
      %v1998 = vadd.f32 %v1414, %v1997
      %v1999 = vpop.f32.mrb[0].mxu0
      %2000 = vmatprep.mubr.bf16.mxu0 0
      %2001 = vmatmul.mubr.bf16.gmra.mrb[0].mxu0 %v1392
      %v2002 = vpop.f32.mrb[0].mxu0
      %v2003 = vadd.f32 %v1414, %v2002
      %v2004 = vpop.f32.mrb[0].mxu0
      %v2005 = vpop.f32.mrb[0].mxu0
      %v2006 = vadd.f32 %v1414, %v2005
      %v2007 = vpop.f32.mrb[0].mxu0
      %2008 = vdwg.mxu0
      %v2009 = vmax.f32 %v1499, 0.0
      %v2010 = vmax.f32 %v1502, 0.0
      %v2011 = vmax.f32 %v1507, 0.0
      %v2012 = vmax.f32 %v1510, 0.0
      %v2013 = vmax.f32 %v1515, 0.0
      %v2014 = vmax.f32 %v1518, 0.0
      %v2015 = vmax.f32 %v1523, 0.0
      %v2016 = vmax.f32 %v1526, 0.0
      %v2017 = vmax.f32 %v1531, 0.0
      %v2018 = vmax.f32 %v1534, 0.0
      %v2019 = vmax.f32 %v1539, 0.0
      %v2020 = vmax.f32 %v1542, 0.0
      %v2021 = vmax.f32 %v1547, 0.0
      %v2022 = vmax.f32 %v1550, 0.0
      %v2023 = vmax.f32 %v1555, 0.0
      %v2024 = vmax.f32 %v1558, 0.0
      %v2025 = vmax.f32 %v1563, 0.0
      %v2026 = vmax.f32 %v1566, 0.0
      %v2027 = vmax.f32 %v1571, 0.0
      %v2028 = vmax.f32 %v1574, 0.0
      %v2029 = vmax.f32 %v1579, 0.0
      %v2030 = vmax.f32 %v1582, 0.0
      %v2031 = vmax.f32 %v1587, 0.0
      %v2032 = vmax.f32 %v1590, 0.0
      %v2033 = vmax.f32 %v1595, 0.0
      %v2034 = vmax.f32 %v1598, 0.0
      %v2035 = vmax.f32 %v1603, 0.0
      %v2036 = vmax.f32 %v1606, 0.0
      %v2037 = vmax.f32 %v1611, 0.0
      %v2038 = vmax.f32 %v1614, 0.0
      %v2039 = vmax.f32 %v1619, 0.0
      %v2040 = vmax.f32 %v1622, 0.0
      %v2041 = vmax.f32 %v1627, 0.0
      %v2042 = vmax.f32 %v1630, 0.0
      %v2043 = vmax.f32 %v1635, 0.0
      %v2044 = vmax.f32 %v1638, 0.0
      %v2045 = vmax.f32 %v1643, 0.0
      %v2046 = vmax.f32 %v1646, 0.0
      %v2047 = vmax.f32 %v1651, 0.0
      %v2048 = vmax.f32 %v1654, 0.0
      %v2049 = vmax.f32 %v1659, 0.0
      %v2050 = vmax.f32 %v1662, 0.0
      %v2051 = vmax.f32 %v1667, 0.0
      %v2052 = vmax.f32 %v1670, 0.0
      %v2053 = vmax.f32 %v1675, 0.0
      %v2054 = vmax.f32 %v1678, 0.0
      %v2055 = vmax.f32 %v1683, 0.0
      %v2056 = vmax.f32 %v1686, 0.0
      %v2057 = vmax.f32 %v1691, 0.0
      %v2058 = vmax.f32 %v1694, 0.0
      %v2059 = vmax.f32 %v1699, 0.0
      %v2060 = vmax.f32 %v1702, 0.0
      %v2061 = vmax.f32 %v1707, 0.0
      %v2062 = vmax.f32 %v1710, 0.0
      %v2063 = vmax.f32 %v1715, 0.0
      %v2064 = vmax.f32 %v1718, 0.0
      %v2065 = vmax.f32 %v1723, 0.0
      %v2066 = vmax.f32 %v1726, 0.0
      %v2067 = vmax.f32 %v1731, 0.0
      %v2068 = vmax.f32 %v1734, 0.0
      %v2069 = vmax.f32 %v1739, 0.0
      %v2070 = vmax.f32 %v1742, 0.0
      %v2071 = vmax.f32 %v1747, 0.0
      %v2072 = vmax.f32 %v1750, 0.0
      %v2073 = vmax.f32 %v1755, 0.0
      %v2074 = vmax.f32 %v1758, 0.0
      %v2075 = vmax.f32 %v1763, 0.0
      %v2076 = vmax.f32 %v1766, 0.0
      %v2077 = vmax.f32 %v1771, 0.0
      %v2078 = vmax.f32 %v1774, 0.0
      %v2079 = vmax.f32 %v1779, 0.0
      %v2080 = vmax.f32 %v1782, 0.0
      %v2081 = vmax.f32 %v1787, 0.0
      %v2082 = vmax.f32 %v1790, 0.0
      %v2083 = vmax.f32 %v1795, 0.0
      %v2084 = vmax.f32 %v1798, 0.0
      %v2085 = vmax.f32 %v1803, 0.0
      %v2086 = vmax.f32 %v1806, 0.0
      %v2087 = vmax.f32 %v1811, 0.0
      %v2088 = vmax.f32 %v1814, 0.0
      %v2089 = vmax.f32 %v1819, 0.0
      %v2090 = vmax.f32 %v1822, 0.0
      %v2091 = vmax.f32 %v1827, 0.0
      %v2092 = vmax.f32 %v1830, 0.0
      %v2093 = vmax.f32 %v1835, 0.0
      %v2094 = vmax.f32 %v1838, 0.0
      %v2095 = vmax.f32 %v1843, 0.0
      %v2096 = vmax.f32 %v1846, 0.0
      %v2097 = vmax.f32 %v1851, 0.0
      %v2098 = vmax.f32 %v1854, 0.0
      %v2099 = vmax.f32 %v1859, 0.0
      %v2100 = vmax.f32 %v1862, 0.0
      %v2101 = vmax.f32 %v1867, 0.0
      %v2102 = vmax.f32 %v1870, 0.0
      %v2103 = vmax.f32 %v1875, 0.0
      %v2104 = vmax.f32 %v1878, 0.0
      %v2105 = vmax.f32 %v1883, 0.0
      %v2106 = vmax.f32 %v1886, 0.0
      %v2107 = vmax.f32 %v1891, 0.0
      %v2108 = vmax.f32 %v1894, 0.0
      %v2109 = vmax.f32 %v1899, 0.0
      %v2110 = vmax.f32 %v1902, 0.0
      %v2111 = vmax.f32 %v1907, 0.0
      %v2112 = vmax.f32 %v1910, 0.0
      %v2113 = vmax.f32 %v1915, 0.0
      %v2114 = vmax.f32 %v1918, 0.0
      %v2115 = vmax.f32 %v1923, 0.0
      %v2116 = vmax.f32 %v1926, 0.0
      %v2117 = vmax.f32 %v1931, 0.0
      %v2118 = vmax.f32 %v1934, 0.0
      %v2119 = vmax.f32 %v1939, 0.0
      %v2120 = vmax.f32 %v1942, 0.0
      %v2121 = vmax.f32 %v1947, 0.0
      %v2122 = vmax.f32 %v1950, 0.0
      %v2123 = vmax.f32 %v1955, 0.0
      %v2124 = vmax.f32 %v1958, 0.0
      %v2125 = vmax.f32 %v1963, 0.0
      %v2126 = vmax.f32 %v1966, 0.0
      %v2127 = vmax.f32 %v1971, 0.0
      %v2128 = vmax.f32 %v1974, 0.0
      %v2129 = vmax.f32 %v1979, 0.0
      %v2130 = vmax.f32 %v1982, 0.0
      %v2131 = vmax.f32 %v1987, 0.0
      %v2132 = vmax.f32 %v1990, 0.0
      %v2133 = vmax.f32 %v1995, 0.0
      %v2134 = vmax.f32 %v1998, 0.0
      %v2135 = vmax.f32 %v2003, 0.0
      %v2136 = vmax.f32 %v2006, 0.0
      %v2137 = vpack.c.bf16 %v2010, %v2009
      %v2138 = vpack.c.bf16 %v2012, %v2011
      %v2139 = vpack.c.bf16 %v2014, %v2013
      %v2140 = vpack.c.bf16 %v2016, %v2015
      %v2141 = vpack.c.bf16 %v2018, %v2017
      %v2142 = vpack.c.bf16 %v2020, %v2019
      %v2143 = vpack.c.bf16 %v2022, %v2021
      %v2144 = vpack.c.bf16 %v2024, %v2023
      %v2145 = vpack.c.bf16 %v2026, %v2025
      %v2146 = vpack.c.bf16 %v2028, %v2027
      %v2147 = vpack.c.bf16 %v2030, %v2029
      %v2148 = vpack.c.bf16 %v2032, %v2031
      %v2149 = vpack.c.bf16 %v2034, %v2033
      %v2150 = vpack.c.bf16 %v2036, %v2035
      %v2151 = vpack.c.bf16 %v2038, %v2037
      %v2152 = vpack.c.bf16 %v2040, %v2039
      %v2153 = vpack.c.bf16 %v2042, %v2041
      %v2154 = vpack.c.bf16 %v2044, %v2043
      %v2155 = vpack.c.bf16 %v2046, %v2045
      %v2156 = vpack.c.bf16 %v2048, %v2047
      %v2157 = vpack.c.bf16 %v2050, %v2049
      %v2158 = vpack.c.bf16 %v2052, %v2051
      %v2159 = vpack.c.bf16 %v2054, %v2053
      %v2160 = vpack.c.bf16 %v2056, %v2055
      %v2161 = vpack.c.bf16 %v2058, %v2057
      %v2162 = vpack.c.bf16 %v2060, %v2059
      %v2163 = vpack.c.bf16 %v2062, %v2061
      %v2164 = vpack.c.bf16 %v2064, %v2063
      %v2165 = vpack.c.bf16 %v2066, %v2065
      %v2166 = vpack.c.bf16 %v2068, %v2067
      %v2167 = vpack.c.bf16 %v2070, %v2069
      %v2168 = vpack.c.bf16 %v2072, %v2071
      %v2169 = vpack.c.bf16 %v2074, %v2073
      %v2170 = vpack.c.bf16 %v2076, %v2075
      %v2171 = vpack.c.bf16 %v2078, %v2077
      %v2172 = vpack.c.bf16 %v2080, %v2079
      %v2173 = vpack.c.bf16 %v2082, %v2081
      %v2174 = vpack.c.bf16 %v2084, %v2083
      %v2175 = vpack.c.bf16 %v2086, %v2085
      %v2176 = vpack.c.bf16 %v2088, %v2087
      %v2177 = vpack.c.bf16 %v2090, %v2089
      %v2178 = vpack.c.bf16 %v2092, %v2091
      %v2179 = vpack.c.bf16 %v2094, %v2093
      %v2180 = vpack.c.bf16 %v2096, %v2095
      %v2181 = vpack.c.bf16 %v2098, %v2097
      %v2182 = vpack.c.bf16 %v2100, %v2099
      %v2183 = vpack.c.bf16 %v2102, %v2101
      %v2184 = vpack.c.bf16 %v2104, %v2103
      %v2185 = vpack.c.bf16 %v2106, %v2105
      %v2186 = vpack.c.bf16 %v2108, %v2107
      %v2187 = vpack.c.bf16 %v2110, %v2109
      %v2188 = vpack.c.bf16 %v2112, %v2111
      %v2189 = vpack.c.bf16 %v2114, %v2113
      %v2190 = vpack.c.bf16 %v2116, %v2115
      %v2191 = vpack.c.bf16 %v2118, %v2117
      %v2192 = vpack.c.bf16 %v2120, %v2119
      %v2193 = vpack.c.bf16 %v2122, %v2121
      %v2194 = vpack.c.bf16 %v2124, %v2123
      %v2195 = vpack.c.bf16 %v2126, %v2125
      %v2196 = vpack.c.bf16 %v2128, %v2127
      %v2197 = vpack.c.bf16 %v2130, %v2129
      %v2198 = vpack.c.bf16 %v2132, %v2131
      %v2199 = vpack.c.bf16 %v2134, %v2133
      %v2200 = vpack.c.bf16 %v2136, %v2135
      %v2201 = vld [vmem:[%s5] sm:$0xf]
      %v2202 = vld [vmem:[%s5 + $0x4] sm:$0xf]
      %v2203 = vld [vmem:[%s5 + $0x8] sm:$0xf]
      %v2204 = vld [vmem:[%s5 + $0xc] sm:$0xf]
      %v2205 = vld [vmem:[%s5 + $0x10] sm:$0xf]
      %v2206 = vld [vmem:[%s5 + $0x14] sm:$0xf]
      %v2207 = vld [vmem:[%s5 + $0x18] sm:$0xf]
      %v2208 = vld [vmem:[%s5 + $0x1c] sm:$0xf]
      %v2209 = vld [vmem:[%s5 + $0x20] sm:$0xf]
      %v2210 = vld [vmem:[%s5 + $0x24] sm:$0xf]
      %v2211 = vld [vmem:[%s5 + $0x28] sm:$0xf]
      %v2212 = vld [vmem:[%s5 + $0x2c] sm:$0xf]
      %v2213 = vld [vmem:[%s5 + $0x30] sm:$0xf]
      %v2214 = vld [vmem:[%s5 + $0x34] sm:$0xf]
      %v2215 = vld [vmem:[%s5 + $0x38] sm:$0xf]
      %v2216 = vld [vmem:[%s5 + $0x3c] sm:$0xf]
      %v2233 = vunpack.c.l.b16 %v2201
      %v2234 = vunpack.c.l.b16 %v2202
      %v2235 = vunpack.c.l.b16 %v2203
      %v2236 = vunpack.c.l.b16 %v2204
      %v2237 = vunpack.c.l.b16 %v2205
      %v2238 = vunpack.c.l.b16 %v2206
      %v2239 = vunpack.c.l.b16 %v2207
      %v2240 = vunpack.c.l.b16 %v2208
      %v2241 = vunpack.c.l.b16 %v2209
      %v2242 = vunpack.c.l.b16 %v2210
      %v2243 = vunpack.c.l.b16 %v2211
      %v2244 = vunpack.c.l.b16 %v2212
      %v2245 = vunpack.c.l.b16 %v2213
      %v2246 = vunpack.c.l.b16 %v2214
      %v2247 = vunpack.c.l.b16 %v2215
      %v2248 = vunpack.c.l.b16 %v2216
      %v2249 = vpack.c.b16 %v2234, %v2233
      %v2250 = vpack.c.b16 %v2236, %v2235
      %v2251 = vpack.c.b16 %v2238, %v2237
      %v2252 = vpack.c.b16 %v2240, %v2239
      %v2253 = vpack.c.b16 %v2242, %v2241
      %v2254 = vpack.c.b16 %v2244, %v2243
      %v2255 = vpack.c.b16 %v2246, %v2245
      %v2256 = vpack.c.b16 %v2248, %v2247
      %2265 = vmatprep.subr.bf16.mxu0 0
      %2266 = vmatpush1.bf16.msra.mxu0 %v2249
      %2267 = vmatprep.subr.bf16.mxu0 0
      %2268 = vmatpush1.bf16.msra.mxu0 %v2250
      %2269 = vmatprep.subr.bf16.mxu0 0
      %2270 = vmatpush1.bf16.msra.mxu0 %v2251
      %2271 = vmatprep.subr.bf16.mxu0 0
      %2272 = vmatpush1.bf16.msra.mxu0 %v2252
      %2273 = vmatprep.subr.bf16.mxu0 0
      %2274 = vmatpush1.bf16.msra.mxu0 %v2253
      %2275 = vmatprep.subr.bf16.mxu0 0
      %2276 = vmatpush1.bf16.msra.mxu0 %v2254
      %2277 = vmatprep.subr.bf16.mxu0 0
      %2278 = vmatpush1.bf16.msra.mxu0 %v2255
      %2279 = vmatprep.subr.bf16.mxu0 0
      %2280 = vmatpush1.bf16.msra.mxu0 %v2256
      %2281 = vmatprep.subr.bf16.mxu0 0
      %2282 = vmatpush1.bf16.msra.mxu0 0
      %2283 = vmatprep.subr.bf16.mxu0 0
      %2284 = vmatpush1.bf16.msra.mxu0 0
      %2285 = vmatprep.subr.bf16.mxu0 0
      %2286 = vmatpush1.bf16.msra.mxu0 0
      %2287 = vmatprep.subr.bf16.mxu0 0
      %2288 = vmatpush1.bf16.msra.mxu0 0
      %2289 = vmatprep.subr.bf16.mxu0 0
      %2290 = vmatpush1.bf16.msra.mxu0 0
      %2291 = vmatprep.subr.bf16.mxu0 0
      %2292 = vmatpush1.bf16.msra.mxu0 0
      %2293 = vmatprep.subr.bf16.mxu0 0
      %2294 = vmatpush1.bf16.msra.mxu0 0
      %2295 = vmatprep.subr.bf16.mxu0 0
      %2296 = vmatpush1.bf16.msra.mxu0 0
      %2297 = vmatprep.mubr.bf16.mxu0 0
      %2298 = vmatmul.mubr.bf16.gmra.mrb[0].mxu0 %v2137
      %v2299 = vpop.f32.mrb[0].mxu0
      %v2300 = vadd.f32 0.0, %v2299
      %v2301 = vpop.f32.mrb[0].mxu0
      %v2302 = vpop.f32.mrb[0].mxu0
      %v2303 = vadd.f32 0.0, %v2302
      %v2304 = vpop.f32.mrb[0].mxu0
      %2305 = vmatprep.mubr.bf16.mxu0 0
      %2306 = vmatmul.mubr.bf16.gmra.mrb[0].mxu0 %v2138
      %v2307 = vpop.f32.mrb[0].mxu0
      %v2308 = vadd.f32 0.0, %v2307
      %v2309 = vpop.f32.mrb[0].mxu0
      %v2310 = vpop.f32.mrb[0].mxu0
      %v2311 = vadd.f32 0.0, %v2310
      %v2312 = vpop.f32.mrb[0].mxu0
      %2313 = vmatprep.mubr.bf16.mxu0 0
      %2314 = vmatmul.mubr.bf16.gmra.mrb[0].mxu0 %v2139
      %v2315 = vpop.f32.mrb[0].mxu0
      %v2316 = vadd.f32 0.0, %v2315
      %v2317 = vpop.f32.mrb[0].mxu0
      %v2318 = vpop.f32.mrb[0].mxu0
      %v2319 = vadd.f32 0.0, %v2318
      %v2320 = vpop.f32.mrb[0].mxu0
      %2321 = vmatprep.mubr.bf16.mxu0 0
      %2322 = vmatmul.mubr.bf16.gmra.mrb[0].mxu0 %v2140
      %v2323 = vpop.f32.mrb[0].mxu0
      %v2324 = vadd.f32 0.0, %v2323
      %v2325 = vpop.f32.mrb[0].mxu0
      %v2326 = vpop.f32.mrb[0].mxu0
      %v2327 = vadd.f32 0.0, %v2326
      %v2328 = vpop.f32.mrb[0].mxu0
      %2329 = vmatprep.mubr.bf16.mxu0 0
      %2330 = vmatmul.mubr.bf16.gmra.mrb[0].mxu0 %v2141
      %v2331 = vpop.f32.mrb[0].mxu0
      %v2332 = vadd.f32 0.0, %v2331
      %v2333 = vpop.f32.mrb[0].mxu0
      %v2334 = vpop.f32.mrb[0].mxu0
      %v2335 = vadd.f32 0.0, %v2334
      %v2336 = vpop.f32.mrb[0].mxu0
      %2337 = vmatprep.mubr.bf16.mxu0 0
      %2338 = vmatmul.mubr.bf16.gmra.mrb[0].mxu0 %v2142
      %v2339 = vpop.f32.mrb[0].mxu0
      %v2340 = vadd.f32 0.0, %v2339
      %v2341 = vpop.f32.mrb[0].mxu0
      %v2342 = vpop.f32.mrb[0].mxu0
      %v2343 = vadd.f32 0.0, %v2342
      %v2344 = vpop.f32.mrb[0].mxu0
      %2345 = vmatprep.mubr.bf16.mxu0 0
      %2346 = vmatmul.mubr.bf16.gmra.mrb[0].mxu0 %v2143
      %v2347 = vpop.f32.mrb[0].mxu0
      %v2348 = vadd.f32 0.0, %v2347
      %v2349 = vpop.f32.mrb[0].mxu0
      %v2350 = vpop.f32.mrb[0].mxu0
      %v2351 = vadd.f32 0.0, %v2350
      %v2352 = vpop.f32.mrb[0].mxu0
      %2353 = vmatprep.mubr.bf16.mxu0 0
      %2354 = vmatmul.mubr.bf16.gmra.mrb[0].mxu0 %v2144
      %v2355 = vpop.f32.mrb[0].mxu0
      %v2356 = vadd.f32 0.0, %v2355
      %v2357 = vpop.f32.mrb[0].mxu0
      %v2358 = vpop.f32.mrb[0].mxu0
      %v2359 = vadd.f32 0.0, %v2358
      %v2360 = vpop.f32.mrb[0].mxu0
      %2361 = vmatprep.mubr.bf16.mxu0 0
      %2362 = vmatmul.mubr.bf16.gmra.mrb[0].mxu0 %v2145
      %v2363 = vpop.f32.mrb[0].mxu0
      %v2364 = vadd.f32 0.0, %v2363
      %v2365 = vpop.f32.mrb[0].mxu0
      %v2366 = vpop.f32.mrb[0].mxu0
      %v2367 = vadd.f32 0.0, %v2366
      %v2368 = vpop.f32.mrb[0].mxu0
      %2369 = vmatprep.mubr.bf16.mxu0 0
      %2370 = vmatmul.mubr.bf16.gmra.mrb[0].mxu0 %v2146
      %v2371 = vpop.f32.mrb[0].mxu0
      %v2372 = vadd.f32 0.0, %v2371
      %v2373 = vpop.f32.mrb[0].mxu0
      %v2374 = vpop.f32.mrb[0].mxu0
      %v2375 = vadd.f32 0.0, %v2374
      %v2376 = vpop.f32.mrb[0].mxu0
      %2377 = vmatprep.mubr.bf16.mxu0 0
      %2378 = vmatmul.mubr.bf16.gmra.mrb[0].mxu0 %v2147
      %v2379 = vpop.f32.mrb[0].mxu0
      %v2380 = vadd.f32 0.0, %v2379
      %v2381 = vpop.f32.mrb[0].mxu0
      %v2382 = vpop.f32.mrb[0].mxu0
      %v2383 = vadd.f32 0.0, %v2382
      %v2384 = vpop.f32.mrb[0].mxu0
      %2385 = vmatprep.mubr.bf16.mxu0 0
      %2386 = vmatmul.mubr.bf16.gmra.mrb[0].mxu0 %v2148
      %v2387 = vpop.f32.mrb[0].mxu0
      %v2388 = vadd.f32 0.0, %v2387
      %v2389 = vpop.f32.mrb[0].mxu0
      %v2390 = vpop.f32.mrb[0].mxu0
      %v2391 = vadd.f32 0.0, %v2390
      %v2392 = vpop.f32.mrb[0].mxu0
      %2393 = vmatprep.mubr.bf16.mxu0 0
      %2394 = vmatmul.mubr.bf16.gmra.mrb[0].mxu0 %v2149
      %v2395 = vpop.f32.mrb[0].mxu0
      %v2396 = vadd.f32 0.0, %v2395
      %v2397 = vpop.f32.mrb[0].mxu0
      %v2398 = vpop.f32.mrb[0].mxu0
      %v2399 = vadd.f32 0.0, %v2398
      %v2400 = vpop.f32.mrb[0].mxu0
      %2401 = vmatprep.mubr.bf16.mxu0 0
      %2402 = vmatmul.mubr.bf16.gmra.mrb[0].mxu0 %v2150
      %v2403 = vpop.f32.mrb[0].mxu0
      %v2404 = vadd.f32 0.0, %v2403
      %v2405 = vpop.f32.mrb[0].mxu0
      %v2406 = vpop.f32.mrb[0].mxu0
      %v2407 = vadd.f32 0.0, %v2406
      %v2408 = vpop.f32.mrb[0].mxu0
      %2409 = vmatprep.mubr.bf16.mxu0 0
      %2410 = vmatmul.mubr.bf16.gmra.mrb[0].mxu0 %v2151
      %v2411 = vpop.f32.mrb[0].mxu0
      %v2412 = vadd.f32 0.0, %v2411
      %v2413 = vpop.f32.mrb[0].mxu0
      %v2414 = vpop.f32.mrb[0].mxu0
      %v2415 = vadd.f32 0.0, %v2414
      %v2416 = vpop.f32.mrb[0].mxu0
      %2417 = vmatprep.mubr.bf16.mxu0 0
      %2418 = vmatmul.mubr.bf16.gmra.mrb[0].mxu0 %v2152
      %v2419 = vpop.f32.mrb[0].mxu0
      %v2420 = vadd.f32 0.0, %v2419
      %v2421 = vpop.f32.mrb[0].mxu0
      %v2422 = vpop.f32.mrb[0].mxu0
      %v2423 = vadd.f32 0.0, %v2422
      %v2424 = vpop.f32.mrb[0].mxu0
      %2425 = vmatprep.mubr.bf16.mxu0 0
      %2426 = vmatmul.mubr.bf16.gmra.mrb[0].mxu0 %v2153
      %v2427 = vpop.f32.mrb[0].mxu0
      %v2428 = vadd.f32 0.0, %v2427
      %v2429 = vpop.f32.mrb[0].mxu0
      %v2430 = vpop.f32.mrb[0].mxu0
      %v2431 = vadd.f32 0.0, %v2430
      %v2432 = vpop.f32.mrb[0].mxu0
      %2433 = vmatprep.mubr.bf16.mxu0 0
      %2434 = vmatmul.mubr.bf16.gmra.mrb[0].mxu0 %v2154
      %v2435 = vpop.f32.mrb[0].mxu0
      %v2436 = vadd.f32 0.0, %v2435
      %v2437 = vpop.f32.mrb[0].mxu0
      %v2438 = vpop.f32.mrb[0].mxu0
      %v2439 = vadd.f32 0.0, %v2438
      %v2440 = vpop.f32.mrb[0].mxu0
      %2441 = vmatprep.mubr.bf16.mxu0 0
      %2442 = vmatmul.mubr.bf16.gmra.mrb[0].mxu0 %v2155
      %v2443 = vpop.f32.mrb[0].mxu0
      %v2444 = vadd.f32 0.0, %v2443
      %v2445 = vpop.f32.mrb[0].mxu0
      %v2446 = vpop.f32.mrb[0].mxu0
      %v2447 = vadd.f32 0.0, %v2446
      %v2448 = vpop.f32.mrb[0].mxu0
      %2449 = vmatprep.mubr.bf16.mxu0 0
      %2450 = vmatmul.mubr.bf16.gmra.mrb[0].mxu0 %v2156
      %v2451 = vpop.f32.mrb[0].mxu0
      %v2452 = vadd.f32 0.0, %v2451
      %v2453 = vpop.f32.mrb[0].mxu0
      %v2454 = vpop.f32.mrb[0].mxu0
      %v2455 = vadd.f32 0.0, %v2454
      %v2456 = vpop.f32.mrb[0].mxu0
      %2457 = vmatprep.mubr.bf16.mxu0 0
      %2458 = vmatmul.mubr.bf16.gmra.mrb[0].mxu0 %v2157
      %v2459 = vpop.f32.mrb[0].mxu0
      %v2460 = vadd.f32 0.0, %v2459
      %v2461 = vpop.f32.mrb[0].mxu0
      %v2462 = vpop.f32.mrb[0].mxu0
      %v2463 = vadd.f32 0.0, %v2462
      %v2464 = vpop.f32.mrb[0].mxu0
      %2465 = vmatprep.mubr.bf16.mxu0 0
      %2466 = vmatmul.mubr.bf16.gmra.mrb[0].mxu0 %v2158
      %v2467 = vpop.f32.mrb[0].mxu0
      %v2468 = vadd.f32 0.0, %v2467
      %v2469 = vpop.f32.mrb[0].mxu0
      %v2470 = vpop.f32.mrb[0].mxu0
      %v2471 = vadd.f32 0.0, %v2470
      %v2472 = vpop.f32.mrb[0].mxu0
      %2473 = vmatprep.mubr.bf16.mxu0 0
      %2474 = vmatmul.mubr.bf16.gmra.mrb[0].mxu0 %v2159
      %v2475 = vpop.f32.mrb[0].mxu0
      %v2476 = vadd.f32 0.0, %v2475
      %v2477 = vpop.f32.mrb[0].mxu0
      %v2478 = vpop.f32.mrb[0].mxu0
      %v2479 = vadd.f32 0.0, %v2478
      %v2480 = vpop.f32.mrb[0].mxu0
      %2481 = vmatprep.mubr.bf16.mxu0 0
      %2482 = vmatmul.mubr.bf16.gmra.mrb[0].mxu0 %v2160
      %v2483 = vpop.f32.mrb[0].mxu0
      %v2484 = vadd.f32 0.0, %v2483
      %v2485 = vpop.f32.mrb[0].mxu0
      %v2486 = vpop.f32.mrb[0].mxu0
      %v2487 = vadd.f32 0.0, %v2486
      %v2488 = vpop.f32.mrb[0].mxu0
      %2489 = vmatprep.mubr.bf16.mxu0 0
      %2490 = vmatmul.mubr.bf16.gmra.mrb[0].mxu0 %v2161
      %v2491 = vpop.f32.mrb[0].mxu0
      %v2492 = vadd.f32 0.0, %v2491
      %v2493 = vpop.f32.mrb[0].mxu0
      %v2494 = vpop.f32.mrb[0].mxu0
      %v2495 = vadd.f32 0.0, %v2494
      %v2496 = vpop.f32.mrb[0].mxu0
      %2497 = vmatprep.mubr.bf16.mxu0 0
      %2498 = vmatmul.mubr.bf16.gmra.mrb[0].mxu0 %v2162
      %v2499 = vpop.f32.mrb[0].mxu0
      %v2500 = vadd.f32 0.0, %v2499
      %v2501 = vpop.f32.mrb[0].mxu0
      %v2502 = vpop.f32.mrb[0].mxu0
      %v2503 = vadd.f32 0.0, %v2502
      %v2504 = vpop.f32.mrb[0].mxu0
      %2505 = vmatprep.mubr.bf16.mxu0 0
      %2506 = vmatmul.mubr.bf16.gmra.mrb[0].mxu0 %v2163
      %v2507 = vpop.f32.mrb[0].mxu0
      %v2508 = vadd.f32 0.0, %v2507
      %v2509 = vpop.f32.mrb[0].mxu0
      %v2510 = vpop.f32.mrb[0].mxu0
      %v2511 = vadd.f32 0.0, %v2510
      %v2512 = vpop.f32.mrb[0].mxu0
      %2513 = vmatprep.mubr.bf16.mxu0 0
      %2514 = vmatmul.mubr.bf16.gmra.mrb[0].mxu0 %v2164
      %v2515 = vpop.f32.mrb[0].mxu0
      %v2516 = vadd.f32 0.0, %v2515
      %v2517 = vpop.f32.mrb[0].mxu0
      %v2518 = vpop.f32.mrb[0].mxu0
      %v2519 = vadd.f32 0.0, %v2518
      %v2520 = vpop.f32.mrb[0].mxu0
      %2521 = vmatprep.mubr.bf16.mxu0 0
      %2522 = vmatmul.mubr.bf16.gmra.mrb[0].mxu0 %v2165
      %v2523 = vpop.f32.mrb[0].mxu0
      %v2524 = vadd.f32 0.0, %v2523
      %v2525 = vpop.f32.mrb[0].mxu0
      %v2526 = vpop.f32.mrb[0].mxu0
      %v2527 = vadd.f32 0.0, %v2526
      %v2528 = vpop.f32.mrb[0].mxu0
      %2529 = vmatprep.mubr.bf16.mxu0 0
      %2530 = vmatmul.mubr.bf16.gmra.mrb[0].mxu0 %v2166
      %v2531 = vpop.f32.mrb[0].mxu0
      %v2532 = vadd.f32 0.0, %v2531
      %v2533 = vpop.f32.mrb[0].mxu0
      %v2534 = vpop.f32.mrb[0].mxu0
      %v2535 = vadd.f32 0.0, %v2534
      %v2536 = vpop.f32.mrb[0].mxu0
      %2537 = vmatprep.mubr.bf16.mxu0 0
      %2538 = vmatmul.mubr.bf16.gmra.mrb[0].mxu0 %v2167
      %v2539 = vpop.f32.mrb[0].mxu0
      %v2540 = vadd.f32 0.0, %v2539
      %v2541 = vpop.f32.mrb[0].mxu0
      %v2542 = vpop.f32.mrb[0].mxu0
      %v2543 = vadd.f32 0.0, %v2542
      %v2544 = vpop.f32.mrb[0].mxu0
      %2545 = vmatprep.mubr.bf16.mxu0 0
      %2546 = vmatmul.mubr.bf16.gmra.mrb[0].mxu0 %v2168
      %v2547 = vpop.f32.mrb[0].mxu0
      %v2548 = vadd.f32 0.0, %v2547
      %v2549 = vpop.f32.mrb[0].mxu0
      %v2550 = vpop.f32.mrb[0].mxu0
      %v2551 = vadd.f32 0.0, %v2550
      %v2552 = vpop.f32.mrb[0].mxu0
      %2553 = vmatprep.mubr.bf16.mxu0 0
      %2554 = vmatmul.mubr.bf16.gmra.mrb[0].mxu0 %v2169
      %v2555 = vpop.f32.mrb[0].mxu0
      %v2556 = vadd.f32 0.0, %v2555
      %v2557 = vpop.f32.mrb[0].mxu0
      %v2558 = vpop.f32.mrb[0].mxu0
      %v2559 = vadd.f32 0.0, %v2558
      %v2560 = vpop.f32.mrb[0].mxu0
      %2561 = vmatprep.mubr.bf16.mxu0 0
      %2562 = vmatmul.mubr.bf16.gmra.mrb[0].mxu0 %v2170
      %v2563 = vpop.f32.mrb[0].mxu0
      %v2564 = vadd.f32 0.0, %v2563
      %v2565 = vpop.f32.mrb[0].mxu0
      %v2566 = vpop.f32.mrb[0].mxu0
      %v2567 = vadd.f32 0.0, %v2566
      %v2568 = vpop.f32.mrb[0].mxu0
      %2569 = vmatprep.mubr.bf16.mxu0 0
      %2570 = vmatmul.mubr.bf16.gmra.mrb[0].mxu0 %v2171
      %v2571 = vpop.f32.mrb[0].mxu0
      %v2572 = vadd.f32 0.0, %v2571
      %v2573 = vpop.f32.mrb[0].mxu0
      %v2574 = vpop.f32.mrb[0].mxu0
      %v2575 = vadd.f32 0.0, %v2574
      %v2576 = vpop.f32.mrb[0].mxu0
      %2577 = vmatprep.mubr.bf16.mxu0 0
      %2578 = vmatmul.mubr.bf16.gmra.mrb[0].mxu0 %v2172
      %v2579 = vpop.f32.mrb[0].mxu0
      %v2580 = vadd.f32 0.0, %v2579
      %v2581 = vpop.f32.mrb[0].mxu0
      %v2582 = vpop.f32.mrb[0].mxu0
      %v2583 = vadd.f32 0.0, %v2582
      %v2584 = vpop.f32.mrb[0].mxu0
      %2585 = vmatprep.mubr.bf16.mxu0 0
      %2586 = vmatmul.mubr.bf16.gmra.mrb[0].mxu0 %v2173
      %v2587 = vpop.f32.mrb[0].mxu0
      %v2588 = vadd.f32 0.0, %v2587
      %v2589 = vpop.f32.mrb[0].mxu0
      %v2590 = vpop.f32.mrb[0].mxu0
      %v2591 = vadd.f32 0.0, %v2590
      %v2592 = vpop.f32.mrb[0].mxu0
      %2593 = vmatprep.mubr.bf16.mxu0 0
      %2594 = vmatmul.mubr.bf16.gmra.mrb[0].mxu0 %v2174
      %v2595 = vpop.f32.mrb[0].mxu0
      %v2596 = vadd.f32 0.0, %v2595
      %v2597 = vpop.f32.mrb[0].mxu0
      %v2598 = vpop.f32.mrb[0].mxu0
      %v2599 = vadd.f32 0.0, %v2598
      %v2600 = vpop.f32.mrb[0].mxu0
      %2601 = vmatprep.mubr.bf16.mxu0 0
      %2602 = vmatmul.mubr.bf16.gmra.mrb[0].mxu0 %v2175
      %v2603 = vpop.f32.mrb[0].mxu0
      %v2604 = vadd.f32 0.0, %v2603
      %v2605 = vpop.f32.mrb[0].mxu0
      %v2606 = vpop.f32.mrb[0].mxu0
      %v2607 = vadd.f32 0.0, %v2606
      %v2608 = vpop.f32.mrb[0].mxu0
      %2609 = vmatprep.mubr.bf16.mxu0 0
      %2610 = vmatmul.mubr.bf16.gmra.mrb[0].mxu0 %v2176
      %v2611 = vpop.f32.mrb[0].mxu0
      %v2612 = vadd.f32 0.0, %v2611
      %v2613 = vpop.f32.mrb[0].mxu0
      %v2614 = vpop.f32.mrb[0].mxu0
      %v2615 = vadd.f32 0.0, %v2614
      %v2616 = vpop.f32.mrb[0].mxu0
      %2617 = vmatprep.mubr.bf16.mxu0 0
      %2618 = vmatmul.mubr.bf16.gmra.mrb[0].mxu0 %v2177
      %v2619 = vpop.f32.mrb[0].mxu0
      %v2620 = vadd.f32 0.0, %v2619
      %v2621 = vpop.f32.mrb[0].mxu0
      %v2622 = vpop.f32.mrb[0].mxu0
      %v2623 = vadd.f32 0.0, %v2622
      %v2624 = vpop.f32.mrb[0].mxu0
      %2625 = vmatprep.mubr.bf16.mxu0 0
      %2626 = vmatmul.mubr.bf16.gmra.mrb[0].mxu0 %v2178
      %v2627 = vpop.f32.mrb[0].mxu0
      %v2628 = vadd.f32 0.0, %v2627
      %v2629 = vpop.f32.mrb[0].mxu0
      %v2630 = vpop.f32.mrb[0].mxu0
      %v2631 = vadd.f32 0.0, %v2630
      %v2632 = vpop.f32.mrb[0].mxu0
      %2633 = vmatprep.mubr.bf16.mxu0 0
      %2634 = vmatmul.mubr.bf16.gmra.mrb[0].mxu0 %v2179
      %v2635 = vpop.f32.mrb[0].mxu0
      %v2636 = vadd.f32 0.0, %v2635
      %v2637 = vpop.f32.mrb[0].mxu0
      %v2638 = vpop.f32.mrb[0].mxu0
      %v2639 = vadd.f32 0.0, %v2638
      %v2640 = vpop.f32.mrb[0].mxu0
      %2641 = vmatprep.mubr.bf16.mxu0 0
      %2642 = vmatmul.mubr.bf16.gmra.mrb[0].mxu0 %v2180
      %v2643 = vpop.f32.mrb[0].mxu0
      %v2644 = vadd.f32 0.0, %v2643
      %v2645 = vpop.f32.mrb[0].mxu0
      %v2646 = vpop.f32.mrb[0].mxu0
      %v2647 = vadd.f32 0.0, %v2646
      %v2648 = vpop.f32.mrb[0].mxu0
      %2649 = vmatprep.mubr.bf16.mxu0 0
      %2650 = vmatmul.mubr.bf16.gmra.mrb[0].mxu0 %v2181
      %v2651 = vpop.f32.mrb[0].mxu0
      %v2652 = vadd.f32 0.0, %v2651
      %v2653 = vpop.f32.mrb[0].mxu0
      %v2654 = vpop.f32.mrb[0].mxu0
      %v2655 = vadd.f32 0.0, %v2654
      %v2656 = vpop.f32.mrb[0].mxu0
      %2657 = vmatprep.mubr.bf16.mxu0 0
      %2658 = vmatmul.mubr.bf16.gmra.mrb[0].mxu0 %v2182
      %v2659 = vpop.f32.mrb[0].mxu0
      %v2660 = vadd.f32 0.0, %v2659
      %v2661 = vpop.f32.mrb[0].mxu0
      %v2662 = vpop.f32.mrb[0].mxu0
      %v2663 = vadd.f32 0.0, %v2662
      %v2664 = vpop.f32.mrb[0].mxu0
      %2665 = vmatprep.mubr.bf16.mxu0 0
      %2666 = vmatmul.mubr.bf16.gmra.mrb[0].mxu0 %v2183
      %v2667 = vpop.f32.mrb[0].mxu0
      %v2668 = vadd.f32 0.0, %v2667
      %v2669 = vpop.f32.mrb[0].mxu0
      %v2670 = vpop.f32.mrb[0].mxu0
      %v2671 = vadd.f32 0.0, %v2670
      %v2672 = vpop.f32.mrb[0].mxu0
      %2673 = vmatprep.mubr.bf16.mxu0 0
      %2674 = vmatmul.mubr.bf16.gmra.mrb[0].mxu0 %v2184
      %v2675 = vpop.f32.mrb[0].mxu0
      %v2676 = vadd.f32 0.0, %v2675
      %v2677 = vpop.f32.mrb[0].mxu0
      %v2678 = vpop.f32.mrb[0].mxu0
      %v2679 = vadd.f32 0.0, %v2678
      %v2680 = vpop.f32.mrb[0].mxu0
      %2681 = vmatprep.mubr.bf16.mxu0 0
      %2682 = vmatmul.mubr.bf16.gmra.mrb[0].mxu0 %v2185
      %v2683 = vpop.f32.mrb[0].mxu0
      %v2684 = vadd.f32 0.0, %v2683
      %v2685 = vpop.f32.mrb[0].mxu0
      %v2686 = vpop.f32.mrb[0].mxu0
      %v2687 = vadd.f32 0.0, %v2686
      %v2688 = vpop.f32.mrb[0].mxu0
      %2689 = vmatprep.mubr.bf16.mxu0 0
      %2690 = vmatmul.mubr.bf16.gmra.mrb[0].mxu0 %v2186
      %v2691 = vpop.f32.mrb[0].mxu0
      %v2692 = vadd.f32 0.0, %v2691
      %v2693 = vpop.f32.mrb[0].mxu0
      %v2694 = vpop.f32.mrb[0].mxu0
      %v2695 = vadd.f32 0.0, %v2694
      %v2696 = vpop.f32.mrb[0].mxu0
      %2697 = vmatprep.mubr.bf16.mxu0 0
      %2698 = vmatmul.mubr.bf16.gmra.mrb[0].mxu0 %v2187
      %v2699 = vpop.f32.mrb[0].mxu0
      %v2700 = vadd.f32 0.0, %v2699
      %v2701 = vpop.f32.mrb[0].mxu0
      %v2702 = vpop.f32.mrb[0].mxu0
      %v2703 = vadd.f32 0.0, %v2702
      %v2704 = vpop.f32.mrb[0].mxu0
      %2705 = vmatprep.mubr.bf16.mxu0 0
      %2706 = vmatmul.mubr.bf16.gmra.mrb[0].mxu0 %v2188
      %v2707 = vpop.f32.mrb[0].mxu0
      %v2708 = vadd.f32 0.0, %v2707
      %v2709 = vpop.f32.mrb[0].mxu0
      %v2710 = vpop.f32.mrb[0].mxu0
      %v2711 = vadd.f32 0.0, %v2710
      %v2712 = vpop.f32.mrb[0].mxu0
      %2713 = vmatprep.mubr.bf16.mxu0 0
      %2714 = vmatmul.mubr.bf16.gmra.mrb[0].mxu0 %v2189
      %v2715 = vpop.f32.mrb[0].mxu0
      %v2716 = vadd.f32 0.0, %v2715
      %v2717 = vpop.f32.mrb[0].mxu0
      %v2718 = vpop.f32.mrb[0].mxu0
      %v2719 = vadd.f32 0.0, %v2718
      %v2720 = vpop.f32.mrb[0].mxu0
      %2721 = vmatprep.mubr.bf16.mxu0 0
      %2722 = vmatmul.mubr.bf16.gmra.mrb[0].mxu0 %v2190
      %v2723 = vpop.f32.mrb[0].mxu0
      %v2724 = vadd.f32 0.0, %v2723
      %v2725 = vpop.f32.mrb[0].mxu0
      %v2726 = vpop.f32.mrb[0].mxu0
      %v2727 = vadd.f32 0.0, %v2726
      %v2728 = vpop.f32.mrb[0].mxu0
      %2729 = vmatprep.mubr.bf16.mxu0 0
      %2730 = vmatmul.mubr.bf16.gmra.mrb[0].mxu0 %v2191
      %v2731 = vpop.f32.mrb[0].mxu0
      %v2732 = vadd.f32 0.0, %v2731
      %v2733 = vpop.f32.mrb[0].mxu0
      %v2734 = vpop.f32.mrb[0].mxu0
      %v2735 = vadd.f32 0.0, %v2734
      %v2736 = vpop.f32.mrb[0].mxu0
      %2737 = vmatprep.mubr.bf16.mxu0 0
      %2738 = vmatmul.mubr.bf16.gmra.mrb[0].mxu0 %v2192
      %v2739 = vpop.f32.mrb[0].mxu0
      %v2740 = vadd.f32 0.0, %v2739
      %v2741 = vpop.f32.mrb[0].mxu0
      %v2742 = vpop.f32.mrb[0].mxu0
      %v2743 = vadd.f32 0.0, %v2742
      %v2744 = vpop.f32.mrb[0].mxu0
      %2745 = vmatprep.mubr.bf16.mxu0 0
      %2746 = vmatmul.mubr.bf16.gmra.mrb[0].mxu0 %v2193
      %v2747 = vpop.f32.mrb[0].mxu0
      %v2748 = vadd.f32 0.0, %v2747
      %v2749 = vpop.f32.mrb[0].mxu0
      %v2750 = vpop.f32.mrb[0].mxu0
      %v2751 = vadd.f32 0.0, %v2750
      %v2752 = vpop.f32.mrb[0].mxu0
      %2753 = vmatprep.mubr.bf16.mxu0 0
      %2754 = vmatmul.mubr.bf16.gmra.mrb[0].mxu0 %v2194
      %v2755 = vpop.f32.mrb[0].mxu0
      %v2756 = vadd.f32 0.0, %v2755
      %v2757 = vpop.f32.mrb[0].mxu0
      %v2758 = vpop.f32.mrb[0].mxu0
      %v2759 = vadd.f32 0.0, %v2758
      %v2760 = vpop.f32.mrb[0].mxu0
      %2761 = vmatprep.mubr.bf16.mxu0 0
      %2762 = vmatmul.mubr.bf16.gmra.mrb[0].mxu0 %v2195
      %v2763 = vpop.f32.mrb[0].mxu0
      %v2764 = vadd.f32 0.0, %v2763
      %v2765 = vpop.f32.mrb[0].mxu0
      %v2766 = vpop.f32.mrb[0].mxu0
      %v2767 = vadd.f32 0.0, %v2766
      %v2768 = vpop.f32.mrb[0].mxu0
      %2769 = vmatprep.mubr.bf16.mxu0 0
      %2770 = vmatmul.mubr.bf16.gmra.mrb[0].mxu0 %v2196
      %v2771 = vpop.f32.mrb[0].mxu0
      %v2772 = vadd.f32 0.0, %v2771
      %v2773 = vpop.f32.mrb[0].mxu0
      %v2774 = vpop.f32.mrb[0].mxu0
      %v2775 = vadd.f32 0.0, %v2774
      %v2776 = vpop.f32.mrb[0].mxu0
      %2777 = vmatprep.mubr.bf16.mxu0 0
      %2778 = vmatmul.mubr.bf16.gmra.mrb[0].mxu0 %v2197
      %v2779 = vpop.f32.mrb[0].mxu0
      %v2780 = vadd.f32 0.0, %v2779
      %v2781 = vpop.f32.mrb[0].mxu0
      %v2782 = vpop.f32.mrb[0].mxu0
      %v2783 = vadd.f32 0.0, %v2782
      %v2784 = vpop.f32.mrb[0].mxu0
      %2785 = vmatprep.mubr.bf16.mxu0 0
      %2786 = vmatmul.mubr.bf16.gmra.mrb[0].mxu0 %v2198
      %v2787 = vpop.f32.mrb[0].mxu0
      %v2788 = vadd.f32 0.0, %v2787
      %v2789 = vpop.f32.mrb[0].mxu0
      %v2790 = vpop.f32.mrb[0].mxu0
      %v2791 = vadd.f32 0.0, %v2790
      %v2792 = vpop.f32.mrb[0].mxu0
      %2793 = vmatprep.mubr.bf16.mxu0 0
      %2794 = vmatmul.mubr.bf16.gmra.mrb[0].mxu0 %v2199
      %v2795 = vpop.f32.mrb[0].mxu0
      %v2796 = vadd.f32 0.0, %v2795
      %v2797 = vpop.f32.mrb[0].mxu0
      %v2798 = vpop.f32.mrb[0].mxu0
      %v2799 = vadd.f32 0.0, %v2798
      %v2800 = vpop.f32.mrb[0].mxu0
      %2801 = vmatprep.mubr.bf16.mxu0 0
      %2802 = vmatmul.mubr.bf16.gmra.mrb[0].mxu0 %v2200
      %v2803 = vpop.f32.mrb[0].mxu0
      %v2804 = vadd.f32 0.0, %v2803
      %v2805 = vpop.f32.mrb[0].mxu0
      %v2806 = vpop.f32.mrb[0].mxu0
      %v2807 = vadd.f32 0.0, %v2806
      %v2808 = vpop.f32.mrb[0].mxu0
      %2809 = vdwg.mxu0
      %2810 = vst.msk [vmem:[%s253] sm:$0xff] %vm463, %v2300
      %2811 = vst.msk [vmem:[%s253 + $0x8] sm:$0xff] %vm463, %v2303
      %2812 = vst.msk [vmem:[%s253 + $0x10] sm:$0xff] %vm463, %v2308
      %2813 = vst.msk [vmem:[%s253 + $0x18] sm:$0xff] %vm463, %v2311
      %2814 = vst.msk [vmem:[%s253 + $0x20] sm:$0xff] %vm463, %v2316
      %2815 = vst.msk [vmem:[%s253 + $0x28] sm:$0xff] %vm463, %v2319
      %2816 = vst.msk [vmem:[%s253 + $0x30] sm:$0xff] %vm463, %v2324
      %2817 = vst.msk [vmem:[%s253 + $0x38] sm:$0xff] %vm463, %v2327
      %2818 = vst.msk [vmem:[%s253 + $0x40] sm:$0xff] %vm463, %v2332
      %2819 = vst.msk [vmem:[%s253 + $0x48] sm:$0xff] %vm463, %v2335
      %2820 = vst.msk [vmem:[%s253 + $0x50] sm:$0xff] %vm463, %v2340
      %2821 = vst.msk [vmem:[%s253 + $0x58] sm:$0xff] %vm463, %v2343
      %2822 = vst.msk [vmem:[%s253 + $0x60] sm:$0xff] %vm463, %v2348
      %2823 = vst.msk [vmem:[%s253 + $0x68] sm:$0xff] %vm463, %v2351
      %2824 = vst.msk [vmem:[%s253 + $0x70] sm:$0xff] %vm463, %v2356
      %2825 = vst.msk [vmem:[%s253 + $0x78] sm:$0xff] %vm463, %v2359
      %2826 = vst.msk [vmem:[%s253 + $0x80] sm:$0xff] %vm463, %v2364
      %2827 = vst.msk [vmem:[%s253 + $0x88] sm:$0xff] %vm463, %v2367
      %2828 = vst.msk [vmem:[%s253 + $0x90] sm:$0xff] %vm463, %v2372
      %2829 = vst.msk [vmem:[%s253 + $0x98] sm:$0xff] %vm463, %v2375
      %2830 = vst.msk [vmem:[%s253 + $0xa0] sm:$0xff] %vm463, %v2380
      %2831 = vst.msk [vmem:[%s253 + $0xa8] sm:$0xff] %vm463, %v2383
      %2832 = vst.msk [vmem:[%s253 + $0xb0] sm:$0xff] %vm463, %v2388
      %2833 = vst.msk [vmem:[%s253 + $0xb8] sm:$0xff] %vm463, %v2391
      %2834 = vst.msk [vmem:[%s253 + $0xc0] sm:$0xff] %vm463, %v2396
      %2835 = vst.msk [vmem:[%s253 + $0xc8] sm:$0xff] %vm463, %v2399
      %2836 = vst.msk [vmem:[%s253 + $0xd0] sm:$0xff] %vm463, %v2404
      %2837 = vst.msk [vmem:[%s253 + $0xd8] sm:$0xff] %vm463, %v2407
      %2838 = vst.msk [vmem:[%s253 + $0xe0] sm:$0xff] %vm463, %v2412
      %2839 = vst.msk [vmem:[%s253 + $0xe8] sm:$0xff] %vm463, %v2415
      %2840 = vst.msk [vmem:[%s253 + $0xf0] sm:$0xff] %vm463, %v2420
      %2841 = vst.msk [vmem:[%s253 + $0xf8] sm:$0xff] %vm463, %v2423
      %2842 = vst.msk [vmem:[%s253 + $0x100] sm:$0xff] %vm463, %v2428
      %2843 = vst.msk [vmem:[%s253 + $0x108] sm:$0xff] %vm463, %v2431
      %2844 = vst.msk [vmem:[%s253 + $0x110] sm:$0xff] %vm463, %v2436
      %2845 = vst.msk [vmem:[%s253 + $0x118] sm:$0xff] %vm463, %v2439
      %2846 = vst.msk [vmem:[%s253 + $0x120] sm:$0xff] %vm463, %v2444
      %2847 = vst.msk [vmem:[%s253 + $0x128] sm:$0xff] %vm463, %v2447
      %2848 = vst.msk [vmem:[%s253 + $0x130] sm:$0xff] %vm463, %v2452
      %2849 = vst.msk [vmem:[%s253 + $0x138] sm:$0xff] %vm463, %v2455
      %2850 = vst.msk [vmem:[%s253 + $0x140] sm:$0xff] %vm463, %v2460
      %2851 = vst.msk [vmem:[%s253 + $0x148] sm:$0xff] %vm463, %v2463
      %2852 = vst.msk [vmem:[%s253 + $0x150] sm:$0xff] %vm463, %v2468
      %2853 = vst.msk [vmem:[%s253 + $0x158] sm:$0xff] %vm463, %v2471
      %2854 = vst.msk [vmem:[%s253 + $0x160] sm:$0xff] %vm463, %v2476
      %2855 = vst.msk [vmem:[%s253 + $0x168] sm:$0xff] %vm463, %v2479
      %2856 = vst.msk [vmem:[%s253 + $0x170] sm:$0xff] %vm463, %v2484
      %2857 = vst.msk [vmem:[%s253 + $0x178] sm:$0xff] %vm463, %v2487
      %2858 = vst.msk [vmem:[%s253 + $0x180] sm:$0xff] %vm463, %v2492
      %2859 = vst.msk [vmem:[%s253 + $0x188] sm:$0xff] %vm463, %v2495
      %2860 = vst.msk [vmem:[%s253 + $0x190] sm:$0xff] %vm463, %v2500
      %2861 = vst.msk [vmem:[%s253 + $0x198] sm:$0xff] %vm463, %v2503
      %2862 = vst.msk [vmem:[%s253 + $0x1a0] sm:$0xff] %vm463, %v2508
      %2863 = vst.msk [vmem:[%s253 + $0x1a8] sm:$0xff] %vm463, %v2511
      %2864 = vst.msk [vmem:[%s253 + $0x1b0] sm:$0xff] %vm463, %v2516
      %2865 = vst.msk [vmem:[%s253 + $0x1b8] sm:$0xff] %vm463, %v2519
      %2866 = vst.msk [vmem:[%s253 + $0x1c0] sm:$0xff] %vm463, %v2524
      %2867 = vst.msk [vmem:[%s253 + $0x1c8] sm:$0xff] %vm463, %v2527
      %2868 = vst.msk [vmem:[%s253 + $0x1d0] sm:$0xff] %vm463, %v2532
      %2869 = vst.msk [vmem:[%s253 + $0x1d8] sm:$0xff] %vm463, %v2535
      %2870 = vst.msk [vmem:[%s253 + $0x1e0] sm:$0xff] %vm463, %v2540
      %2871 = vst.msk [vmem:[%s253 + $0x1e8] sm:$0xff] %vm463, %v2543
      %2872 = vst.msk [vmem:[%s253 + $0x1f0] sm:$0xff] %vm463, %v2548
      %2873 = vst.msk [vmem:[%s253 + $0x1f8] sm:$0xff] %vm463, %v2551
      %2874 = vst.msk [vmem:[%s253 + $0x200] sm:$0xff] %vm463, %v2556
      %2875 = vst.msk [vmem:[%s253 + $0x208] sm:$0xff] %vm463, %v2559
      %2876 = vst.msk [vmem:[%s253 + $0x210] sm:$0xff] %vm463, %v2564
      %2877 = vst.msk [vmem:[%s253 + $0x218] sm:$0xff] %vm463, %v2567
      %2878 = vst.msk [vmem:[%s253 + $0x220] sm:$0xff] %vm463, %v2572
      %2879 = vst.msk [vmem:[%s253 + $0x228] sm:$0xff] %vm463, %v2575
      %2880 = vst.msk [vmem:[%s253 + $0x230] sm:$0xff] %vm463, %v2580
      %2881 = vst.msk [vmem:[%s253 + $0x238] sm:$0xff] %vm463, %v2583
      %2882 = vst.msk [vmem:[%s253 + $0x240] sm:$0xff] %vm463, %v2588
      %2883 = vst.msk [vmem:[%s253 + $0x248] sm:$0xff] %vm463, %v2591
      %2884 = vst.msk [vmem:[%s253 + $0x250] sm:$0xff] %vm463, %v2596
      %2885 = vst.msk [vmem:[%s253 + $0x258] sm:$0xff] %vm463, %v2599
      %2886 = vst.msk [vmem:[%s253 + $0x260] sm:$0xff] %vm463, %v2604
      %2887 = vst.msk [vmem:[%s253 + $0x268] sm:$0xff] %vm463, %v2607
      %2888 = vst.msk [vmem:[%s253 + $0x270] sm:$0xff] %vm463, %v2612
      %2889 = vst.msk [vmem:[%s253 + $0x278] sm:$0xff] %vm463, %v2615
      %2890 = vst.msk [vmem:[%s253 + $0x280] sm:$0xff] %vm463, %v2620
      %2891 = vst.msk [vmem:[%s253 + $0x288] sm:$0xff] %vm463, %v2623
      %2892 = vst.msk [vmem:[%s253 + $0x290] sm:$0xff] %vm463, %v2628
      %2893 = vst.msk [vmem:[%s253 + $0x298] sm:$0xff] %vm463, %v2631
      %2894 = vst.msk [vmem:[%s253 + $0x2a0] sm:$0xff] %vm463, %v2636
      %2895 = vst.msk [vmem:[%s253 + $0x2a8] sm:$0xff] %vm463, %v2639
      %2896 = vst.msk [vmem:[%s253 + $0x2b0] sm:$0xff] %vm463, %v2644
      %2897 = vst.msk [vmem:[%s253 + $0x2b8] sm:$0xff] %vm463, %v2647
      %2898 = vst.msk [vmem:[%s253 + $0x2c0] sm:$0xff] %vm463, %v2652
      %2899 = vst.msk [vmem:[%s253 + $0x2c8] sm:$0xff] %vm463, %v2655
      %2900 = vst.msk [vmem:[%s253 + $0x2d0] sm:$0xff] %vm463, %v2660
      %2901 = vst.msk [vmem:[%s253 + $0x2d8] sm:$0xff] %vm463, %v2663
      %2902 = vst.msk [vmem:[%s253 + $0x2e0] sm:$0xff] %vm463, %v2668
      %2903 = vst.msk [vmem:[%s253 + $0x2e8] sm:$0xff] %vm463, %v2671
      %2904 = vst.msk [vmem:[%s253 + $0x2f0] sm:$0xff] %vm463, %v2676
      %2905 = vst.msk [vmem:[%s253 + $0x2f8] sm:$0xff] %vm463, %v2679
      %2906 = vst.msk [vmem:[%s253 + $0x300] sm:$0xff] %vm463, %v2684
      %2907 = vst.msk [vmem:[%s253 + $0x308] sm:$0xff] %vm463, %v2687
      %2908 = vst.msk [vmem:[%s253 + $0x310] sm:$0xff] %vm463, %v2692
      %2909 = vst.msk [vmem:[%s253 + $0x318] sm:$0xff] %vm463, %v2695
      %2910 = vst.msk [vmem:[%s253 + $0x320] sm:$0xff] %vm463, %v2700
      %2911 = vst.msk [vmem:[%s253 + $0x328] sm:$0xff] %vm463, %v2703
      %2912 = vst.msk [vmem:[%s253 + $0x330] sm:$0xff] %vm463, %v2708
      %2913 = vst.msk [vmem:[%s253 + $0x338] sm:$0xff] %vm463, %v2711
      %2914 = vst.msk [vmem:[%s253 + $0x340] sm:$0xff] %vm463, %v2716
      %2915 = vst.msk [vmem:[%s253 + $0x348] sm:$0xff] %vm463, %v2719
      %2916 = vst.msk [vmem:[%s253 + $0x350] sm:$0xff] %vm463, %v2724
      %2917 = vst.msk [vmem:[%s253 + $0x358] sm:$0xff] %vm463, %v2727
      %2918 = vst.msk [vmem:[%s253 + $0x360] sm:$0xff] %vm463, %v2732
      %2919 = vst.msk [vmem:[%s253 + $0x368] sm:$0xff] %vm463, %v2735
      %2920 = vst.msk [vmem:[%s253 + $0x370] sm:$0xff] %vm463, %v2740
      %2921 = vst.msk [vmem:[%s253 + $0x378] sm:$0xff] %vm463, %v2743
      %2922 = vst.msk [vmem:[%s253 + $0x380] sm:$0xff] %vm463, %v2748
      %2923 = vst.msk [vmem:[%s253 + $0x388] sm:$0xff] %vm463, %v2751
      %2924 = vst.msk [vmem:[%s253 + $0x390] sm:$0xff] %vm463, %v2756
      %2925 = vst.msk [vmem:[%s253 + $0x398] sm:$0xff] %vm463, %v2759
      %2926 = vst.msk [vmem:[%s253 + $0x3a0] sm:$0xff] %vm463, %v2764
      %2927 = vst.msk [vmem:[%s253 + $0x3a8] sm:$0xff] %vm463, %v2767
      %2928 = vst.msk [vmem:[%s253 + $0x3b0] sm:$0xff] %vm463, %v2772
      %2929 = vst.msk [vmem:[%s253 + $0x3b8] sm:$0xff] %vm463, %v2775
      %2930 = vst.msk [vmem:[%s253 + $0x3c0] sm:$0xff] %vm463, %v2780
      %2931 = vst.msk [vmem:[%s253 + $0x3c8] sm:$0xff] %vm463, %v2783
      %2932 = vst.msk [vmem:[%s253 + $0x3d0] sm:$0xff] %vm463, %v2788
      %2933 = vst.msk [vmem:[%s253 + $0x3d8] sm:$0xff] %vm463, %v2791
      %2934 = vst.msk [vmem:[%s253 + $0x3e0] sm:$0xff] %vm463, %v2796
      %2935 = vst.msk [vmem:[%s253 + $0x3e8] sm:$0xff] %vm463, %v2799
      %2936 = vst.msk [vmem:[%s253 + $0x3f0] sm:$0xff] %vm463, %v2804
      %2937 = vst.msk [vmem:[%s253 + $0x3f8] sm:$0xff] %vm463, %v2807
      %s2938 = smul.u32 128, %s17
      %p2939 = scmp.lt.s32.totalorder %s2938, 255
      %s2940 = scalar_select %p2939, %s2938, 255
      %s2941 = smul.addr %s2940, 8
      %s2942 = scalar_lea.vmem %s6, %s2941
      // Predicated region
      $region45: #{tpu_custom_call.1} parent=43 // pred_check
        %p2943 = pneg %p166
      $region46: #{tpu_custom_call.1} parent=43 // pred_check_branch
        %2945 = sbr.rel (%p2943) target = $region48
      $region47: #{tpu_custom_call.1} parent=43 // pred_region
        %s2946 = smul.u32 128, %s17
      $region48: #{tpu_custom_call.1} parent=43 // pred_fallthru
        _
    $region44: #{tpu_custom_call.1} parent=5 // pred_fallthru
      _
    %p2947 = scmp.le.s32.totalorder 2, %s12
    // Predicated region
    $region49: #{tpu_custom_call.1} parent=5 // pred_check
      %p2948 = pneg %p2947
    $region50: #{tpu_custom_call.1} parent=5 // pred_check_branch
      %2950 = sbr.rel (%p2948) target = $region52
    $region51: #{tpu_custom_call.1} parent=5 // pred_region
      %s2951 = ssub.s32 %s12, 2
      // Predicated region
      $region53: #{tpu_custom_call.1} parent=51 // pred_check
        %p2952 = pneg %p172
      $region54: #{tpu_custom_call.1} parent=51 // pred_check_branch
        %2954 = sbr.rel (%p2952) target = $region56
      $region55: #{tpu_custom_call.1} parent=51 // pred_region
        %s2955 = smul.u32 128, %s18
        %p2956 = scmp.lt.s32.totalorder %s2955, 255
        %s2957 = scalar_select %p2956, %s2955, 255
        %s2958 = smul.addr %s2957, 8
        %s2959 = scalar_lea.vmem %s6, %s2958
      $region56: #{tpu_custom_call.1} parent=51 // pred_fallthru
        _
    $region52: #{tpu_custom_call.1} parent=5 // pred_fallthru
      _
  $region6: #{tpu_custom_call.1} parent=0 // loop_footer
    %s16 = sadd.s32 1, %s12
  $region7: #{tpu_custom_call.1} parent=0 // loop_footer_branch
    %11 = sbr.rel target = $region3
  $region8: #{tpu_custom_call.1} parent=0 // loop_exit
    _

</llo_original>
